<compile_context>
chip_gen: v7x
topology: tpu7x:2x2x1
jax: 0.10.0
libtpu: 0.0.40
codegen_flags: <defaults>
</compile_context>

<pallas_src>
import jax
import jax.numpy as jnp
from jax.experimental import pallas as pl
from jax.experimental.pallas import tpu as pltpu

FEAT = 128                    # base_model.get_shape() stand-in (lane aligned)
H1, H2, H3 = 1024, 512, 256
OUT_CLASSES = 5
OUT_PAD = 128                 # lane-dense padded output width (>= OUT_CLASSES)

_MIN_MEGACORE_TILE = 128      # below this, splitting for 2 TCs isn't worth it


def _round_up(x, m):
    return (x + m - 1) // m * m


def _mlp_head_kernel(x_ref,
                     w1_ref, b1_ref,
                     w2_ref, b2_ref,
                     w3_ref, b3_ref,
                     w4_ref, b4_ref,
                     o_ref):
    """Fused fc1->relu->fc2->relu->fc3->relu->fc4 (raw logits) on one batch tile.

    bf16 MXU matmuls with f32 accumulation; bias add / relu in f32 on the VPU,
    then the activation is materialized in bf16 (halves intermediate VMEM and
    is numerically identical to casting at the next matmul's input).
    """
    h = x_ref[...].astype(jnp.bfloat16)                              # (TB, FEAT)

    h = jnp.dot(h, w1_ref[...], preferred_element_type=jnp.float32)
    h = jnp.maximum(h + b1_ref[...], 0.0).astype(jnp.bfloat16)       # (TB, H1)

    h = jnp.dot(h, w2_ref[...], preferred_element_type=jnp.float32)
    h = jnp.maximum(h + b2_ref[...], 0.0).astype(jnp.bfloat16)       # (TB, H2)

    h = jnp.dot(h, w3_ref[...], preferred_element_type=jnp.float32)
    h = jnp.maximum(h + b3_ref[...], 0.0).astype(jnp.bfloat16)       # (TB, H3)

    logits = jnp.dot(h, w4_ref[...], preferred_element_type=jnp.float32)
    o_ref[...] = logits + b4_ref[...]                                # (TB, OUT_PAD) f32


def _choose_tile(B, tile_b):
    """Pick a sublane-aligned batch tile.

    Rules:
      * never exceed the (8-rounded) batch,
      * when the batch is big enough, keep >= 2 grid steps so the "parallel"
        batch axis can shard across both TensorCores on v7x,
      * multiples of 8 only (sublane constraint on the BlockSpec).
    """
    b8 = _round_up(B, 8)
    tile_b = min(tile_b, b8)
    if b8 >= 2 * _MIN_MEGACORE_TILE:
        tile_b = min(tile_b, max(_MIN_MEGACORE_TILE, _round_up(b8 // 2, 8)))
    return max(8, _round_up(tile_b, 8))


def classifier_ptb_forward(x, params, *, tile_b=1024):
    """x: (B, FEAT) float32 features from base_model (identity stand-in).

    params: packed kernel params from pack_params() — bf16 (in, out) weights,
    f32 (1, out) biases, fc4 padded to OUT_PAD columns.

    tile_b guidance: 512-1024 on all generations (the MXU M dimension is
    streamed, so the tile does not need to match the MXU width); the helper
    clips it for small batches and keeps >=2 grid steps for v7x megacore.
    """
    B, F = x.shape
    assert F == FEAT
    w1, b1, w2, b2, w3, b3, w4, b4 = params

    tile_b = _choose_tile(B, tile_b)
    b_pad = _round_up(B, tile_b)
    if b_pad != B:
        x = jnp.pad(x, ((0, b_pad - B), (0, 0)))

    grid = (b_pad // tile_b,)

    # Whole-array, VMEM-resident (single-buffered) weight/bias inputs
    # (~1.7 MiB total in bf16; fits every generation).
    resident = pl.BlockSpec(memory_space=pltpu.MemorySpace.VMEM)

    flops = 2 * b_pad * (FEAT * H1 + H1 * H2 + H2 * H3 + H3 * OUT_PAD)
    weight_bytes = sum(int(a.size) * a.dtype.itemsize for a in params)
    bytes_accessed = weight_bytes + b_pad * FEAT * 4 + b_pad * OUT_PAD * 4

    # VMEM budget @ tile_b=1024: weights ~1.7 MiB + x/out double buffers ~2 MiB
    # + bf16/f32 intermediates ~8-10 MiB  =>  well under 32 MiB even on v7x.
    logits = pl.pallas_call(
        _mlp_head_kernel,
        out_shape=jax.ShapeDtypeStruct((b_pad, OUT_PAD), jnp.float32),
        grid=grid,
        in_specs=[
            pl.BlockSpec((tile_b, FEAT), lambda i: (i, 0)),          # x tile (pipelined)
            resident, resident,                                      # w1, b1
            resident, resident,                                      # w2, b2
            resident, resident,                                      # w3, b3
            resident, resident,                                      # w4, b4 (padded)
        ],
        out_specs=pl.BlockSpec((tile_b, OUT_PAD), lambda i: (i, 0)),
        compiler_params=pltpu.CompilerParams(
            dimension_semantics=("parallel",),
            vmem_limit_bytes=32 * 1024 * 1024),
        cost_estimate=pl.CostEstimate(
            flops=flops,
            transcendentals=0,                 # sigmoid moved to the wrapper
            bytes_accessed=bytes_accessed),
    )(x, w1, b1, w2, b2, w3, b3, w4, b4)

    # Slice off batch padding + the 123 zero-padded fc4 columns, then sigmoid
    # on just (B, 5) — 25x less transcendental work than in-kernel over OUT_PAD.
    return jax.nn.sigmoid(logits[:B, :OUT_CLASSES])


def init_params(key):
    """torch.nn.Linear-style init: U[-1/sqrt(fan_in), 1/sqrt(fan_in)].

    Returns the "raw" f32 params as a list of (W_in_out, b) pairs (weights
    already transposed to (in, out) so the kernel does x @ W).
    """
    dims = [(FEAT, H1), (H1, H2), (H2, H3), (H3, OUT_CLASSES)]
    raw = []
    for fan_in, fan_out in dims:
        key, kw, kb = jax.random.split(key, 3)
        bound = 1.0 / jnp.sqrt(fan_in)
        w = jax.random.uniform(kw, (fan_in, fan_out), jnp.float32, -bound, bound)
        b = jax.random.uniform(kb, (fan_out,), jnp.float32, -bound, bound)
        raw.append((w, b))
    return raw


def pack_params(raw):
    """Kernel layout: bf16 weights, f32 (1, out) biases, fc4 padded to OUT_PAD."""
    packed = []
    for i, (w, b) in enumerate(raw):
        if i == len(raw) - 1:
            w = jnp.pad(w, ((0, 0), (0, OUT_PAD - OUT_CLASSES)))     # zero pad cols
            b = jnp.pad(b, ((0, OUT_PAD - OUT_CLASSES),))
        packed.append(w.astype(jnp.bfloat16))
        packed.append(b.reshape(1, -1).astype(jnp.float32))
    return tuple(packed)


def reference_forward_bf16(x, raw):
    """Pure-JAX reference emulating the kernel's bf16-matmul / f32-accumulate math."""
    def dot_bf16(a, w):
        return jnp.dot(a.astype(jnp.bfloat16), w.astype(jnp.bfloat16),
                       preferred_element_type=jnp.float32)
    (w1, b1), (w2, b2), (w3, b3), (w4, b4) = raw
    h = jnp.maximum(dot_bf16(x, w1) + b1, 0.0)
    h = jnp.maximum(dot_bf16(h, w2) + b2, 0.0)
    h = jnp.maximum(dot_bf16(h, w3) + b3, 0.0)
    return jax.nn.sigmoid(dot_bf16(h, w4) + b4)


def reference_forward_f32(x, raw):
    """Pure f32 reference matching the original PyTorch Classifier_ptb math."""
    (w1, b1), (w2, b2), (w3, b3), (w4, b4) = raw
    h = jnp.maximum(jnp.dot(x, w1) + b1, 0.0)
    h = jnp.maximum(jnp.dot(h, w2) + b2, 0.0)
    h = jnp.maximum(jnp.dot(h, w3) + b3, 0.0)
    return jax.nn.sigmoid(jnp.dot(h, w4) + b4)


if __name__ == "__main__":
    key = jax.random.PRNGKey(0)
    key, kx = jax.random.split(key)

    B = 16
    # base_model(x) output features (base_model == identity stand-in)
    x = jax.random.normal(kx, (B, FEAT), jnp.float32)

    raw = init_params(key)
    params = pack_params(raw)

    out = classifier_ptb_forward(x, params)
    out = jax.block_until_ready(out)
    assert out.shape == (B, OUT_CLASSES)

    # Tight check against a reference that emulates the kernel's bf16/f32 math.
    ref_bf16 = reference_forward_bf16(x, raw)
    err_bf16 = float(jnp.max(jnp.abs(out - ref_bf16)))
    assert jnp.allclose(out, ref_bf16, atol=1e-3, rtol=1e-3), err_bf16

    # Looser check against the pure-f32 PyTorch-equivalent math, to confirm the
    # bf16 weight/activation quantization stays within product tolerance.
    ref_f32 = reference_forward_f32(x, raw)
    err_f32 = float(jnp.max(jnp.abs(out - ref_f32)))
    assert jnp.allclose(out, ref_f32, atol=3e-2, rtol=3e-2), err_f32

    print("KERNEL_OK")
</pallas_src>

<mosaic_0001>
module attributes {stable_mosaic.version = 11 : i64} {
  func.func @_mlp_head_kernel(%arg0: i32, %arg1: memref<16x128xf32, #tpu.memory_space<vmem>>, %arg2: memref<128x1024xbf16, #tpu.memory_space<vmem>>, %arg3: memref<1x1024xf32, #tpu.memory_space<vmem>>, %arg4: memref<1024x512xbf16, #tpu.memory_space<vmem>>, %arg5: memref<1x512xf32, #tpu.memory_space<vmem>>, %arg6: memref<512x256xbf16, #tpu.memory_space<vmem>>, %arg7: memref<1x256xf32, #tpu.memory_space<vmem>>, %arg8: memref<256x128xbf16, #tpu.memory_space<vmem>>, %arg9: memref<1x128xf32, #tpu.memory_space<vmem>>, %arg10: memref<16x128xf32, #tpu.memory_space<vmem>>) attributes {dimension_semantics = [#tpu.dimension_semantics<parallel>], iteration_bounds = array<i64: 1>, scalar_prefetch = 0 : i64, scratch_operands = 0 : i64, tpu.core_type = #tpu.core_type<tc>, window_params = [{transform_indices = @transform_0, window_bounds = array<i64: 16, 128>}, {pipeline_mode = #tpu.pipeline_mode<synchronous>, transform_indices = @transform_1, window_bounds = array<i64: 128, 1024>}, {pipeline_mode = #tpu.pipeline_mode<synchronous>, transform_indices = @transform_2, window_bounds = array<i64: 1, 1024>}, {pipeline_mode = #tpu.pipeline_mode<synchronous>, transform_indices = @transform_3, window_bounds = array<i64: 1024, 512>}, {pipeline_mode = #tpu.pipeline_mode<synchronous>, transform_indices = @transform_4, window_bounds = array<i64: 1, 512>}, {pipeline_mode = #tpu.pipeline_mode<synchronous>, transform_indices = @transform_5, window_bounds = array<i64: 512, 256>}, {pipeline_mode = #tpu.pipeline_mode<synchronous>, transform_indices = @transform_6, window_bounds = array<i64: 1, 256>}, {pipeline_mode = #tpu.pipeline_mode<synchronous>, transform_indices = @transform_7, window_bounds = array<i64: 256, 128>}, {pipeline_mode = #tpu.pipeline_mode<synchronous>, transform_indices = @transform_8, window_bounds = array<i64: 1, 128>}, {transform_indices = @transform_9, window_bounds = array<i64: 16, 128>}]} {
    %c0 = arith.constant 0 : index
    %c0_0 = arith.constant 0 : index
    %0 = vector.load %arg1[%c0, %c0_0] : memref<16x128xf32, #tpu.memory_space<vmem>>, vector<16x128xf32>
    %1 = arith.truncf %0 : vector<16x128xf32> to vector<16x128xbf16>
    %c0_1 = arith.constant 0 : index
    %c0_2 = arith.constant 0 : index
    %2 = vector.load %arg2[%c0_1, %c0_2] : memref<128x1024xbf16, #tpu.memory_space<vmem>>, vector<128x1024xbf16>
    %cst = arith.constant dense<0.000000e+00> : vector<16x1024xf32>
    %3 = tpu.matmul %1, %2, %cst {dimension_numbers = #tpu.dot_dimension_numbers<[1], [0], [0], [1], [0, 0, 1, 1], [], []>} : vector<16x128xbf16>, vector<128x1024xbf16>, vector<16x1024xf32> -> vector<16x1024xf32>
    %c0_3 = arith.constant 0 : index
    %c0_4 = arith.constant 0 : index
    %4 = vector.load %arg3[%c0_3, %c0_4] : memref<1x1024xf32, #tpu.memory_space<vmem>>, vector<1x1024xf32>
    %5 = vector.broadcast %4 : vector<1x1024xf32> to vector<16x1024xf32>
    %6 = arith.addf %3, %5 : vector<16x1024xf32>
    %cst_5 = arith.constant 0.000000e+00 : f32
    %7 = vector.broadcast %cst_5 : f32 to vector<16x1024xf32>
    %8 = arith.maximumf %6, %7 : vector<16x1024xf32>
    %9 = arith.truncf %8 : vector<16x1024xf32> to vector<16x1024xbf16>
    %c0_6 = arith.constant 0 : index
    %c0_7 = arith.constant 0 : index
    %10 = vector.load %arg4[%c0_6, %c0_7] : memref<1024x512xbf16, #tpu.memory_space<vmem>>, vector<1024x512xbf16>
    %cst_8 = arith.constant dense<0.000000e+00> : vector<16x512xf32>
    %11 = tpu.matmul %9, %10, %cst_8 {dimension_numbers = #tpu.dot_dimension_numbers<[1], [0], [0], [1], [0, 0, 1, 1], [], []>} : vector<16x1024xbf16>, vector<1024x512xbf16>, vector<16x512xf32> -> vector<16x512xf32>
    %c0_9 = arith.constant 0 : index
    %c0_10 = arith.constant 0 : index
    %12 = vector.load %arg5[%c0_9, %c0_10] : memref<1x512xf32, #tpu.memory_space<vmem>>, vector<1x512xf32>
    %13 = vector.broadcast %12 : vector<1x512xf32> to vector<16x512xf32>
    %14 = arith.addf %11, %13 : vector<16x512xf32>
    %cst_11 = arith.constant 0.000000e+00 : f32
    %15 = vector.broadcast %cst_11 : f32 to vector<16x512xf32>
    %16 = arith.maximumf %14, %15 : vector<16x512xf32>
    %17 = arith.truncf %16 : vector<16x512xf32> to vector<16x512xbf16>
    %c0_12 = arith.constant 0 : index
    %c0_13 = arith.constant 0 : index
    %18 = vector.load %arg6[%c0_12, %c0_13] : memref<512x256xbf16, #tpu.memory_space<vmem>>, vector<512x256xbf16>
    %cst_14 = arith.constant dense<0.000000e+00> : vector<16x256xf32>
    %19 = tpu.matmul %17, %18, %cst_14 {dimension_numbers = #tpu.dot_dimension_numbers<[1], [0], [0], [1], [0, 0, 1, 1], [], []>} : vector<16x512xbf16>, vector<512x256xbf16>, vector<16x256xf32> -> vector<16x256xf32>
    %c0_15 = arith.constant 0 : index
    %c0_16 = arith.constant 0 : index
    %20 = vector.load %arg7[%c0_15, %c0_16] : memref<1x256xf32, #tpu.memory_space<vmem>>, vector<1x256xf32>
    %21 = vector.broadcast %20 : vector<1x256xf32> to vector<16x256xf32>
    %22 = arith.addf %19, %21 : vector<16x256xf32>
    %cst_17 = arith.constant 0.000000e+00 : f32
    %23 = vector.broadcast %cst_17 : f32 to vector<16x256xf32>
    %24 = arith.maximumf %22, %23 : vector<16x256xf32>
    %25 = arith.truncf %24 : vector<16x256xf32> to vector<16x256xbf16>
    %c0_18 = arith.constant 0 : index
    %c0_19 = arith.constant 0 : index
    %26 = vector.load %arg8[%c0_18, %c0_19] : memref<256x128xbf16, #tpu.memory_space<vmem>>, vector<256x128xbf16>
    %cst_20 = arith.constant dense<0.000000e+00> : vector<16x128xf32>
    %27 = tpu.matmul %25, %26, %cst_20 {dimension_numbers = #tpu.dot_dimension_numbers<[1], [0], [0], [1], [0, 0, 1, 1], [], []>} : vector<16x256xbf16>, vector<256x128xbf16>, vector<16x128xf32> -> vector<16x128xf32>
    %c0_21 = arith.constant 0 : index
    %c0_22 = arith.constant 0 : index
    %28 = vector.load %arg9[%c0_21, %c0_22] : memref<1x128xf32, #tpu.memory_space<vmem>>, vector<1x128xf32>
    %29 = vector.broadcast %28 : vector<1x128xf32> to vector<16x128xf32>
    %30 = arith.addf %27, %29 : vector<16x128xf32>
    %c0_23 = arith.constant 0 : index
    %c0_24 = arith.constant 0 : index
    %31 = vector.load %arg10[%c0_23, %c0_24] : memref<16x128xf32, #tpu.memory_space<vmem>>, vector<16x128xf32>
    tpu.vector_store %arg10[%c0_23, %c0_24], %30 {strides = array<i32>} : memref<16x128xf32, #tpu.memory_space<vmem>>, vector<16x128xf32>,
    return
  }
  func.func @transform_0(%arg0: i32) -> (i32, i32) {
    %c0_i32 = arith.constant 0 : i32
    %c0_i32_0 = arith.constant 0 : i32
    return %arg0, %c0_i32 : i32, i32
  }
  func.func @transform_1(%arg0: i32) -> (i32, i32) {
    %c0_i32 = arith.constant 0 : i32
    %c0_i32_0 = arith.constant 0 : i32
    %c0_i32_1 = arith.constant 0 : i32
    return %c0_i32, %c0_i32_0 : i32, i32
  }
  func.func @transform_2(%arg0: i32) -> (i32, i32) {
    %c0_i32 = arith.constant 0 : i32
    %c0_i32_0 = arith.constant 0 : i32
    %c0_i32_1 = arith.constant 0 : i32
    return %c0_i32, %c0_i32_0 : i32, i32
  }
  func.func @transform_3(%arg0: i32) -> (i32, i32) {
    %c0_i32 = arith.constant 0 : i32
    %c0_i32_0 = arith.constant 0 : i32
    %c0_i32_1 = arith.constant 0 : i32
    return %c0_i32, %c0_i32_0 : i32, i32
  }
  func.func @transform_4(%arg0: i32) -> (i32, i32) {
    %c0_i32 = arith.constant 0 : i32
    %c0_i32_0 = arith.constant 0 : i32
    %c0_i32_1 = arith.constant 0 : i32
    return %c0_i32, %c0_i32_0 : i32, i32
  }
  func.func @transform_5(%arg0: i32) -> (i32, i32) {
    %c0_i32 = arith.constant 0 : i32
    %c0_i32_0 = arith.constant 0 : i32
    %c0_i32_1 = arith.constant 0 : i32
    return %c0_i32, %c0_i32_0 : i32, i32
  }
  func.func @transform_6(%arg0: i32) -> (i32, i32) {
    %c0_i32 = arith.constant 0 : i32
    %c0_i32_0 = arith.constant 0 : i32
    %c0_i32_1 = arith.constant 0 : i32
    return %c0_i32, %c0_i32_0 : i32, i32
  }
  func.func @transform_7(%arg0: i32) -> (i32, i32) {
    %c0_i32 = arith.constant 0 : i32
    %c0_i32_0 = arith.constant 0 : i32
    %c0_i32_1 = arith.constant 0 : i32
    return %c0_i32, %c0_i32_0 : i32, i32
  }
  func.func @transform_8(%arg0: i32) -> (i32, i32) {
    %c0_i32 = arith.constant 0 : i32
    %c0_i32_0 = arith.constant 0 : i32
    %c0_i32_1 = arith.constant 0 : i32
    return %c0_i32, %c0_i32_0 : i32, i32
  }
  func.func @transform_9(%arg0: i32) -> (i32, i32) {
    %c0_i32 = arith.constant 0 : i32
    %c0_i32_0 = arith.constant 0 : i32
    return %arg0, %c0_i32 : i32, i32
  }
}

</mosaic_0001>

<llo_original>
// kernel: tpu_custom_call.1
$region0: #{tpu_custom_call.1}
  #allocation0 [shape = 'u32[]', space=smem, size = 0x4, offset = 0x4, fixed_abs, tag = 'smem constant byte address 0x4 - core index']
  #allocation1 [shape = 'u32[144,128]{1,0:T(1,128)}', space=vmem, size = 0x12000, scoped, tag = 'internal scratch']
  %s0 = inlined_call_operand.hbm [shape: f32[16,128], index: 0, kind: input, shape index: {}]
  %s1 = inlined_call_operand.hbm [shape: bf16[128,1024], index: 1, kind: input, shape index: {}]
  %s2 = inlined_call_operand.hbm [shape: f32[1,1024], index: 2, kind: input, shape index: {}]
  %s3 = inlined_call_operand.hbm [shape: bf16[1024,512], index: 3, kind: input, shape index: {}]
  %s4 = inlined_call_operand.vmem [shape: f32[1,512], index: 4, kind: input, shape index: {}]
  %s5 = inlined_call_operand.hbm [shape: bf16[512,256], index: 5, kind: input, shape index: {}]
  %s6 = inlined_call_operand.vmem [shape: f32[1,256], index: 6, kind: input, shape index: {}]
  %s7 = inlined_call_operand.hbm [shape: bf16[256,128], index: 7, kind: input, shape index: {}]
  %s8 = inlined_call_operand.vmem [shape: f32[1,128], index: 8, kind: input, shape index: {}]
  %s9 = inlined_call_operand.hbm [shape: f32[16,128], index: 9, kind: output, shape index: {}]
  %s10 = sld [smem:[#allocation0]]
  $region70: #{tpu_custom_call.1} parent=0
    _
  %s12 = ssub.s32 1, %s10
  %s13 = scalar_select 0, %s12, %s10
  $region1: #{tpu_custom_call.1} parent=0
    #allocation2 [shape = 'u8[8192]{0}', space=vmem, size = 0x2000, scoped, tag = 'input window, operand 0, single buffered']
    #allocation3 [shape = 's32[1]{0}', space=sflag, size = 0x4, scoped, tag = 'scoped memory for tpu_custom_call.1']
    #allocation4 [shape = 's32[1]{0}', space=sflag, size = 0x4, scoped, tag = 'scoped memory for tpu_custom_call.1']
    #allocation5 [shape = 'u8[262144]{0}', space=vmem, size = 0x40000, scoped, tag = 'input window, operand 1, single buffered']
    #allocation6 [shape = 's32[1]{0}', space=sflag, size = 0x4, scoped, tag = 'scoped memory for tpu_custom_call.1']
    #allocation7 [shape = 'u8[4096]{0}', space=vmem, size = 0x1000, scoped, tag = 'input window, operand 2, single buffered']
    #allocation8 [shape = 'u8[1048576]{0}', space=vmem, size = 0x100000, scoped, tag = 'input window, operand 3, single buffered']
    #allocation9 [shape = 's32[1]{0}', space=sflag, size = 0x4, scoped, tag = 'scoped memory for tpu_custom_call.1']
    #allocation10 [shape = 'u8[262144]{0}', space=vmem, size = 0x40000, scoped, tag = 'input window, operand 5, single buffered']
    #allocation11 [shape = 'u8[65536]{0}', space=vmem, size = 0x10000, scoped, tag = 'input window, operand 7, single buffered']
    #allocation12 [shape = 's32[1]{0}', space=sflag, size = 0x4, scoped, tag = 'scoped memory for tpu_custom_call.1']
    #allocation13 [shape = 'u8[8192]{0}', space=vmem, size = 0x2000, scoped, tag = 'output window, operand 0, single buffered']
    %14 = vsyncpa [#allocation3], 0
    %15 = vsyncpa [#allocation6], 0
    %16 = vsyncpa [#allocation9], 0
    %17 = vsyncpa [#allocation12], 0
    %18 = vsyncpa [#allocation4], 0
    // Predicated region
    $region2: #{tpu_custom_call.1} parent=1 // pred_check
      _
    $region3: #{tpu_custom_call.1} parent=1 // pred_check_branch
      %20 = sbr.rel (0) target = $region5
    $region4: #{tpu_custom_call.1} parent=1 // pred_region
      %s22 = ssub.s32 256, 256
      %23 = vsyncadd [#allocation3], %s22
      %s24 = sshll.u32 [#allocation2], 4
      %s25 = int_to_ptr.vmem [resolvable:$true] %s24
      %30 = dma.hbm_to_vmem [thread:$0]  %s0, 256, %s25, [#allocation3], 128, 128, 8
    $region5: #{tpu_custom_call.1} parent=1 // pred_fallthru
      _
    // Predicated region
    $region6: #{tpu_custom_call.1} parent=1 // pred_check
      _
    $region7: #{tpu_custom_call.1} parent=1 // pred_check_branch
      %32 = sbr.rel (0) target = $region9
    $region8: #{tpu_custom_call.1} parent=1 // pred_region
      %s34 = ssub.s32 8192, 8192
      %35 = vsyncadd [#allocation6], %s34
      %s36 = sshll.u32 [#allocation5], 4
      %s37 = int_to_ptr.vmem [resolvable:$true] %s36
      %42 = dma.hbm_to_vmem [thread:$0]  %s1, 8192, %s37, [#allocation6], 512, 512, 32
    $region9: #{tpu_custom_call.1} parent=1 // pred_fallthru
      _
    // Predicated region
    $region10: #{tpu_custom_call.1} parent=1 // pred_check
      _
    $region11: #{tpu_custom_call.1} parent=1 // pred_check_branch
      %44 = sbr.rel (0) target = $region13
    $region12: #{tpu_custom_call.1} parent=1 // pred_region
      %s46 = ssub.s32 128, 128
      %47 = vsyncadd [#allocation6], %s46
      %s49 = sshll.u32 [#allocation7], 4
      %s50 = int_to_ptr.vmem [resolvable:$true] %s49
      %52 = dma.hbm_to_vmem [thread:$0]  %s2, 128, %s50, [#allocation6]
    $region13: #{tpu_custom_call.1} parent=1 // pred_fallthru
      _
    // Predicated region
    $region14: #{tpu_custom_call.1} parent=1 // pred_check
      _
    $region15: #{tpu_custom_call.1} parent=1 // pred_check_branch
      %54 = sbr.rel (0) target = $region17
    $region16: #{tpu_custom_call.1} parent=1 // pred_region
      %s56 = ssub.s32 32768, 32768
      %57 = vsyncadd [#allocation9], %s56
      %s58 = sshll.u32 [#allocation8], 4
      %s59 = int_to_ptr.vmem [resolvable:$true] %s58
      %64 = dma.hbm_to_vmem [thread:$0]  %s3, 32768, %s59, [#allocation9], 256, 256, 16
    $region17: #{tpu_custom_call.1} parent=1 // pred_fallthru
      _
    // Predicated region
    $region18: #{tpu_custom_call.1} parent=1 // pred_check
      _
    $region19: #{tpu_custom_call.1} parent=1 // pred_check_branch
      %66 = sbr.rel (0) target = $region21
    $region20: #{tpu_custom_call.1} parent=1 // pred_region
      _
    $region21: #{tpu_custom_call.1} parent=1 // pred_fallthru
      _
    // Predicated region
    $region22: #{tpu_custom_call.1} parent=1 // pred_check
      _
    $region23: #{tpu_custom_call.1} parent=1 // pred_check_branch
      %68 = sbr.rel (0) target = $region25
    $region24: #{tpu_custom_call.1} parent=1 // pred_region
      %s70 = ssub.s32 8192, 8192
      %71 = vsyncadd [#allocation9], %s70
      %s72 = sshll.u32 [#allocation10], 4
      %s73 = int_to_ptr.vmem [resolvable:$true] %s72
      %78 = dma.hbm_to_vmem [thread:$0]  %s5, 8192, %s73, [#allocation9], 128, 128, 8
    $region25: #{tpu_custom_call.1} parent=1 // pred_fallthru
      _
    // Predicated region
    $region26: #{tpu_custom_call.1} parent=1 // pred_check
      _
    $region27: #{tpu_custom_call.1} parent=1 // pred_check_branch
      %80 = sbr.rel (0) target = $region29
    $region28: #{tpu_custom_call.1} parent=1 // pred_region
      _
    $region29: #{tpu_custom_call.1} parent=1 // pred_fallthru
      _
    // Predicated region
    $region30: #{tpu_custom_call.1} parent=1 // pred_check
      _
    $region31: #{tpu_custom_call.1} parent=1 // pred_check_branch
      %82 = sbr.rel (0) target = $region33
    $region32: #{tpu_custom_call.1} parent=1 // pred_region
      %s84 = ssub.s32 2048, 2048
      %85 = vsyncadd [#allocation12], %s84
      %s86 = sshll.u32 [#allocation11], 4
      %s87 = int_to_ptr.vmem [resolvable:$true] %s86
      %92 = dma.hbm_to_vmem [thread:$0]  %s7, 2048, %s87, [#allocation12], 64, 64, 4
    $region33: #{tpu_custom_call.1} parent=1 // pred_fallthru
      _
    // Predicated region
    $region34: #{tpu_custom_call.1} parent=1 // pred_check
      _
    $region35: #{tpu_custom_call.1} parent=1 // pred_check_branch
      %94 = sbr.rel (0) target = $region37
    $region36: #{tpu_custom_call.1} parent=1 // pred_region
      _
    $region37: #{tpu_custom_call.1} parent=1 // pred_fallthru
      _
    // Predicated region
    $region38: #{tpu_custom_call.1} parent=1 // pred_check
      _
    $region39: #{tpu_custom_call.1} parent=1 // pred_check_branch
      %96 = sbr.rel (0) target = $region41
    $region40: #{tpu_custom_call.1} parent=1 // pred_region
      %97 = dma.done [#allocation3], 256
    $region41: #{tpu_custom_call.1} parent=1 // pred_fallthru
      _
    // Predicated region
    $region42: #{tpu_custom_call.1} parent=1 // pred_check
      _
    $region43: #{tpu_custom_call.1} parent=1 // pred_check_branch
      %99 = sbr.rel (0) target = $region45
    $region44: #{tpu_custom_call.1} parent=1 // pred_region
      %100 = dma.done [#allocation6], 8192
    $region45: #{tpu_custom_call.1} parent=1 // pred_fallthru
      _
    // Predicated region
    $region46: #{tpu_custom_call.1} parent=1 // pred_check
      _
    $region47: #{tpu_custom_call.1} parent=1 // pred_check_branch
      %102 = sbr.rel (0) target = $region49
    $region48: #{tpu_custom_call.1} parent=1 // pred_region
      %103 = dma.done [#allocation6], 128
    $region49: #{tpu_custom_call.1} parent=1 // pred_fallthru
      _
    // Predicated region
    $region50: #{tpu_custom_call.1} parent=1 // pred_check
      _
    $region51: #{tpu_custom_call.1} parent=1 // pred_check_branch
      %105 = sbr.rel (0) target = $region53
    $region52: #{tpu_custom_call.1} parent=1 // pred_region
      %106 = dma.done [#allocation9], 32768
    $region53: #{tpu_custom_call.1} parent=1 // pred_fallthru
      _
    // Predicated region
    $region54: #{tpu_custom_call.1} parent=1 // pred_check
      _
    $region55: #{tpu_custom_call.1} parent=1 // pred_check_branch
      %108 = sbr.rel (0) target = $region57
    $region56: #{tpu_custom_call.1} parent=1 // pred_region
      %109 = dma.done [#allocation9], 8192
    $region57: #{tpu_custom_call.1} parent=1 // pred_fallthru
      _
    // Predicated region
    $region58: #{tpu_custom_call.1} parent=1 // pred_check
      _
    $region59: #{tpu_custom_call.1} parent=1 // pred_check_branch
      %111 = sbr.rel (0) target = $region61
    $region60: #{tpu_custom_call.1} parent=1 // pred_region
      %112 = dma.done [#allocation12], 2048
    $region61: #{tpu_custom_call.1} parent=1 // pred_fallthru
      _
    %v114 = vld [vmem:[#allocation2] sm:$0xff]
    %v115 = vld [vmem:[#allocation2 + $0x8] sm:$0xff]
    %v116 = vpack.c.bf16 %v115, %v114
    %v117 = vld [vmem:[#allocation5] sm:$0xff]
    %v118 = vld [vmem:[#allocation5 + $0x8] sm:$0xff]
    %v119 = vld [vmem:[#allocation5 + $0x10] sm:$0xff]
    %v120 = vld [vmem:[#allocation5 + $0x18] sm:$0xff]
    %v121 = vld [vmem:[#allocation5 + $0x20] sm:$0xff]
    %v122 = vld [vmem:[#allocation5 + $0x28] sm:$0xff]
    %v123 = vld [vmem:[#allocation5 + $0x30] sm:$0xff]
    %v124 = vld [vmem:[#allocation5 + $0x38] sm:$0xff]
    %v125 = vld [vmem:[#allocation5 + $0x40] sm:$0xff]
    %v126 = vld [vmem:[#allocation5 + $0x48] sm:$0xff]
    %v127 = vld [vmem:[#allocation5 + $0x50] sm:$0xff]
    %v128 = vld [vmem:[#allocation5 + $0x58] sm:$0xff]
    %v129 = vld [vmem:[#allocation5 + $0x60] sm:$0xff]
    %v130 = vld [vmem:[#allocation5 + $0x68] sm:$0xff]
    %v131 = vld [vmem:[#allocation5 + $0x70] sm:$0xff]
    %v132 = vld [vmem:[#allocation5 + $0x78] sm:$0xff]
    %v133 = vld [vmem:[#allocation5 + $0x80] sm:$0xff]
    %v134 = vld [vmem:[#allocation5 + $0x88] sm:$0xff]
    %v135 = vld [vmem:[#allocation5 + $0x90] sm:$0xff]
    %v136 = vld [vmem:[#allocation5 + $0x98] sm:$0xff]
    %v137 = vld [vmem:[#allocation5 + $0xa0] sm:$0xff]
    %v138 = vld [vmem:[#allocation5 + $0xa8] sm:$0xff]
    %v139 = vld [vmem:[#allocation5 + $0xb0] sm:$0xff]
    %v140 = vld [vmem:[#allocation5 + $0xb8] sm:$0xff]
    %v141 = vld [vmem:[#allocation5 + $0xc0] sm:$0xff]
    %v142 = vld [vmem:[#allocation5 + $0xc8] sm:$0xff]
    %v143 = vld [vmem:[#allocation5 + $0xd0] sm:$0xff]
    %v144 = vld [vmem:[#allocation5 + $0xd8] sm:$0xff]
    %v145 = vld [vmem:[#allocation5 + $0xe0] sm:$0xff]
    %v146 = vld [vmem:[#allocation5 + $0xe8] sm:$0xff]
    %v147 = vld [vmem:[#allocation5 + $0xf0] sm:$0xff]
    %v148 = vld [vmem:[#allocation5 + $0xf8] sm:$0xff]
    %v149 = vld [vmem:[#allocation5 + $0x100] sm:$0xff]
    %v150 = vld [vmem:[#allocation5 + $0x108] sm:$0xff]
    %v151 = vld [vmem:[#allocation5 + $0x110] sm:$0xff]
    %v152 = vld [vmem:[#allocation5 + $0x118] sm:$0xff]
    %v153 = vld [vmem:[#allocation5 + $0x120] sm:$0xff]
    %v154 = vld [vmem:[#allocation5 + $0x128] sm:$0xff]
    %v155 = vld [vmem:[#allocation5 + $0x130] sm:$0xff]
    %v156 = vld [vmem:[#allocation5 + $0x138] sm:$0xff]
    %v157 = vld [vmem:[#allocation5 + $0x140] sm:$0xff]
    %v158 = vld [vmem:[#allocation5 + $0x148] sm:$0xff]
    %v159 = vld [vmem:[#allocation5 + $0x150] sm:$0xff]
    %v160 = vld [vmem:[#allocation5 + $0x158] sm:$0xff]
    %v161 = vld [vmem:[#allocation5 + $0x160] sm:$0xff]
    %v162 = vld [vmem:[#allocation5 + $0x168] sm:$0xff]
    %v163 = vld [vmem:[#allocation5 + $0x170] sm:$0xff]
    %v164 = vld [vmem:[#allocation5 + $0x178] sm:$0xff]
    %v165 = vld [vmem:[#allocation5 + $0x180] sm:$0xff]
    %v166 = vld [vmem:[#allocation5 + $0x188] sm:$0xff]
    %v167 = vld [vmem:[#allocation5 + $0x190] sm:$0xff]
    %v168 = vld [vmem:[#allocation5 + $0x198] sm:$0xff]
    %v169 = vld [vmem:[#allocation5 + $0x1a0] sm:$0xff]
    %v170 = vld [vmem:[#allocation5 + $0x1a8] sm:$0xff]
    %v171 = vld [vmem:[#allocation5 + $0x1b0] sm:$0xff]
    %v172 = vld [vmem:[#allocation5 + $0x1b8] sm:$0xff]
    %v173 = vld [vmem:[#allocation5 + $0x1c0] sm:$0xff]
    %v174 = vld [vmem:[#allocation5 + $0x1c8] sm:$0xff]
    %v175 = vld [vmem:[#allocation5 + $0x1d0] sm:$0xff]
    %v176 = vld [vmem:[#allocation5 + $0x1d8] sm:$0xff]
    %v177 = vld [vmem:[#allocation5 + $0x1e0] sm:$0xff]
    %v178 = vld [vmem:[#allocation5 + $0x1e8] sm:$0xff]
    %v179 = vld [vmem:[#allocation5 + $0x1f0] sm:$0xff]
    %v180 = vld [vmem:[#allocation5 + $0x1f8] sm:$0xff]
    %v181 = vld [vmem:[#allocation7] sm:$0xff]
    %v183 = vlaneseq
    %v184 = vshrl.u32 %v183, 7
    %v185 = vsub.s32 0, %v184
    %v186 = vrot.slane %v181, %v185
    %v187 = vlaneseq
    %v188 = vshrl.u32 %v187, 7
    %v189 = vsub.s32 1, %v188
    %v190 = vrot.slane %v181, %v189
    %v191 = vlaneseq
    %v192 = vshrl.u32 %v191, 7
    %v193 = vsub.s32 2, %v192
    %v194 = vrot.slane %v181, %v193
    %v195 = vlaneseq
    %v196 = vshrl.u32 %v195, 7
    %v197 = vsub.s32 3, %v196
    %v198 = vrot.slane %v181, %v197
    %v199 = vlaneseq
    %v200 = vshrl.u32 %v199, 7
    %v201 = vsub.s32 4, %v200
    %v202 = vrot.slane %v181, %v201
    %v203 = vlaneseq
    %v204 = vshrl.u32 %v203, 7
    %v205 = vsub.s32 5, %v204
    %v206 = vrot.slane %v181, %v205
    %v207 = vlaneseq
    %v208 = vshrl.u32 %v207, 7
    %v209 = vsub.s32 6, %v208
    %v210 = vrot.slane %v181, %v209
    %v211 = vlaneseq
    %v212 = vshrl.u32 %v211, 7
    %v213 = vsub.s32 7, %v212
    %v214 = vrot.slane %v181, %v213
    %v287 = vunpack.c.l.b16 %v117
    %v288 = vunpack.c.h.b16 %v117
    %v289 = vunpack.c.l.b16 %v118
    %v290 = vunpack.c.h.b16 %v118
    %v291 = vunpack.c.l.b16 %v119
    %v292 = vunpack.c.h.b16 %v119
    %v293 = vunpack.c.l.b16 %v120
    %v294 = vunpack.c.h.b16 %v120
    %v295 = vunpack.c.l.b16 %v121
    %v296 = vunpack.c.h.b16 %v121
    %v297 = vunpack.c.l.b16 %v122
    %v298 = vunpack.c.h.b16 %v122
    %v299 = vunpack.c.l.b16 %v123
    %v300 = vunpack.c.h.b16 %v123
    %v301 = vunpack.c.l.b16 %v124
    %v302 = vunpack.c.h.b16 %v124
    %v303 = vunpack.c.l.b16 %v125
    %v304 = vunpack.c.h.b16 %v125
    %v305 = vunpack.c.l.b16 %v126
    %v306 = vunpack.c.h.b16 %v126
    %v307 = vunpack.c.l.b16 %v127
    %v308 = vunpack.c.h.b16 %v127
    %v309 = vunpack.c.l.b16 %v128
    %v310 = vunpack.c.h.b16 %v128
    %v311 = vunpack.c.l.b16 %v129
    %v312 = vunpack.c.h.b16 %v129
    %v313 = vunpack.c.l.b16 %v130
    %v314 = vunpack.c.h.b16 %v130
    %v315 = vunpack.c.l.b16 %v131
    %v316 = vunpack.c.h.b16 %v131
    %v317 = vunpack.c.l.b16 %v132
    %v318 = vunpack.c.h.b16 %v132
    %v319 = vunpack.c.l.b16 %v133
    %v320 = vunpack.c.h.b16 %v133
    %v321 = vunpack.c.l.b16 %v134
    %v322 = vunpack.c.h.b16 %v134
    %v323 = vunpack.c.l.b16 %v135
    %v324 = vunpack.c.h.b16 %v135
    %v325 = vunpack.c.l.b16 %v136
    %v326 = vunpack.c.h.b16 %v136
    %v327 = vunpack.c.l.b16 %v137
    %v328 = vunpack.c.h.b16 %v137
    %v329 = vunpack.c.l.b16 %v138
    %v330 = vunpack.c.h.b16 %v138
    %v331 = vunpack.c.l.b16 %v139
    %v332 = vunpack.c.h.b16 %v139
    %v333 = vunpack.c.l.b16 %v140
    %v334 = vunpack.c.h.b16 %v140
    %v335 = vunpack.c.l.b16 %v141
    %v336 = vunpack.c.h.b16 %v141
    %v337 = vunpack.c.l.b16 %v142
    %v338 = vunpack.c.h.b16 %v142
    %v339 = vunpack.c.l.b16 %v143
    %v340 = vunpack.c.h.b16 %v143
    %v341 = vunpack.c.l.b16 %v144
    %v342 = vunpack.c.h.b16 %v144
    %v343 = vunpack.c.l.b16 %v145
    %v344 = vunpack.c.h.b16 %v145
    %v345 = vunpack.c.l.b16 %v146
    %v346 = vunpack.c.h.b16 %v146
    %v347 = vunpack.c.l.b16 %v147
    %v348 = vunpack.c.h.b16 %v147
    %v349 = vunpack.c.l.b16 %v148
    %v350 = vunpack.c.h.b16 %v148
    %v351 = vunpack.c.l.b16 %v149
    %v352 = vunpack.c.h.b16 %v149
    %v353 = vunpack.c.l.b16 %v150
    %v354 = vunpack.c.h.b16 %v150
    %v355 = vunpack.c.l.b16 %v151
    %v356 = vunpack.c.h.b16 %v151
    %v357 = vunpack.c.l.b16 %v152
    %v358 = vunpack.c.h.b16 %v152
    %v359 = vunpack.c.l.b16 %v153
    %v360 = vunpack.c.h.b16 %v153
    %v361 = vunpack.c.l.b16 %v154
    %v362 = vunpack.c.h.b16 %v154
    %v363 = vunpack.c.l.b16 %v155
    %v364 = vunpack.c.h.b16 %v155
    %v365 = vunpack.c.l.b16 %v156
    %v366 = vunpack.c.h.b16 %v156
    %v367 = vunpack.c.l.b16 %v157
    %v368 = vunpack.c.h.b16 %v157
    %v369 = vunpack.c.l.b16 %v158
    %v370 = vunpack.c.h.b16 %v158
    %v371 = vunpack.c.l.b16 %v159
    %v372 = vunpack.c.h.b16 %v159
    %v373 = vunpack.c.l.b16 %v160
    %v374 = vunpack.c.h.b16 %v160
    %v375 = vunpack.c.l.b16 %v161
    %v376 = vunpack.c.h.b16 %v161
    %v377 = vunpack.c.l.b16 %v162
    %v378 = vunpack.c.h.b16 %v162
    %v379 = vunpack.c.l.b16 %v163
    %v380 = vunpack.c.h.b16 %v163
    %v381 = vunpack.c.l.b16 %v164
    %v382 = vunpack.c.h.b16 %v164
    %v383 = vunpack.c.l.b16 %v165
    %v384 = vunpack.c.h.b16 %v165
    %v385 = vunpack.c.l.b16 %v166
    %v386 = vunpack.c.h.b16 %v166
    %v387 = vunpack.c.l.b16 %v167
    %v388 = vunpack.c.h.b16 %v167
    %v389 = vunpack.c.l.b16 %v168
    %v390 = vunpack.c.h.b16 %v168
    %v391 = vunpack.c.l.b16 %v169
    %v392 = vunpack.c.h.b16 %v169
    %v393 = vunpack.c.l.b16 %v170
    %v394 = vunpack.c.h.b16 %v170
    %v395 = vunpack.c.l.b16 %v171
    %v396 = vunpack.c.h.b16 %v171
    %v397 = vunpack.c.l.b16 %v172
    %v398 = vunpack.c.h.b16 %v172
    %v399 = vunpack.c.l.b16 %v173
    %v400 = vunpack.c.h.b16 %v173
    %v401 = vunpack.c.l.b16 %v174
    %v402 = vunpack.c.h.b16 %v174
    %v403 = vunpack.c.l.b16 %v175
    %v404 = vunpack.c.h.b16 %v175
    %v405 = vunpack.c.l.b16 %v176
    %v406 = vunpack.c.h.b16 %v176
    %v407 = vunpack.c.l.b16 %v177
    %v408 = vunpack.c.h.b16 %v177
    %v409 = vunpack.c.l.b16 %v178
    %v410 = vunpack.c.h.b16 %v178
    %v411 = vunpack.c.l.b16 %v179
    %v412 = vunpack.c.h.b16 %v179
    %v413 = vunpack.c.l.b16 %v180
    %v414 = vunpack.c.h.b16 %v180
    %v415 = vpack.c.b16 %v295, %v287
    %v416 = vpack.c.b16 %v296, %v288
    %v417 = vpack.c.b16 %v297, %v289
    %v418 = vpack.c.b16 %v298, %v290
    %v419 = vpack.c.b16 %v299, %v291
    %v420 = vpack.c.b16 %v300, %v292
    %v421 = vpack.c.b16 %v301, %v293
    %v422 = vpack.c.b16 %v302, %v294
    %v423 = vpack.c.b16 %v311, %v303
    %v424 = vpack.c.b16 %v312, %v304
    %v425 = vpack.c.b16 %v313, %v305
    %v426 = vpack.c.b16 %v314, %v306
    %v427 = vpack.c.b16 %v315, %v307
    %v428 = vpack.c.b16 %v316, %v308
    %v429 = vpack.c.b16 %v317, %v309
    %v430 = vpack.c.b16 %v318, %v310
    %v431 = vpack.c.b16 %v327, %v319
    %v432 = vpack.c.b16 %v328, %v320
    %v433 = vpack.c.b16 %v329, %v321
    %v434 = vpack.c.b16 %v330, %v322
    %v435 = vpack.c.b16 %v331, %v323
    %v436 = vpack.c.b16 %v332, %v324
    %v437 = vpack.c.b16 %v333, %v325
    %v438 = vpack.c.b16 %v334, %v326
    %v439 = vpack.c.b16 %v343, %v335
    %v440 = vpack.c.b16 %v344, %v336
    %v441 = vpack.c.b16 %v345, %v337
    %v442 = vpack.c.b16 %v346, %v338
    %v443 = vpack.c.b16 %v347, %v339
    %v444 = vpack.c.b16 %v348, %v340
    %v445 = vpack.c.b16 %v349, %v341
    %v446 = vpack.c.b16 %v350, %v342
    %v447 = vpack.c.b16 %v359, %v351
    %v448 = vpack.c.b16 %v360, %v352
    %v449 = vpack.c.b16 %v361, %v353
    %v450 = vpack.c.b16 %v362, %v354
    %v451 = vpack.c.b16 %v363, %v355
    %v452 = vpack.c.b16 %v364, %v356
    %v453 = vpack.c.b16 %v365, %v357
    %v454 = vpack.c.b16 %v366, %v358
    %v455 = vpack.c.b16 %v375, %v367
    %v456 = vpack.c.b16 %v376, %v368
    %v457 = vpack.c.b16 %v377, %v369
    %v458 = vpack.c.b16 %v378, %v370
    %v459 = vpack.c.b16 %v379, %v371
    %v460 = vpack.c.b16 %v380, %v372
    %v461 = vpack.c.b16 %v381, %v373
    %v462 = vpack.c.b16 %v382, %v374
    %v463 = vpack.c.b16 %v391, %v383
    %v464 = vpack.c.b16 %v392, %v384
    %v465 = vpack.c.b16 %v393, %v385
    %v466 = vpack.c.b16 %v394, %v386
    %v467 = vpack.c.b16 %v395, %v387
    %v468 = vpack.c.b16 %v396, %v388
    %v469 = vpack.c.b16 %v397, %v389
    %v470 = vpack.c.b16 %v398, %v390
    %v471 = vpack.c.b16 %v407, %v399
    %v472 = vpack.c.b16 %v408, %v400
    %v473 = vpack.c.b16 %v409, %v401
    %v474 = vpack.c.b16 %v410, %v402
    %v475 = vpack.c.b16 %v411, %v403
    %v476 = vpack.c.b16 %v412, %v404
    %v477 = vpack.c.b16 %v413, %v405
    %v478 = vpack.c.b16 %v414, %v406
    %543 = vmatprep.subr.bf16.mxu0 %v416
    %544 = vmatpush1.bf16.msra.mxu0 %v415
    %545 = vmatprep.subr.bf16.mxu0 %v424
    %546 = vmatpush1.bf16.msra.mxu0 %v423
    %547 = vmatprep.subr.bf16.mxu0 %v432
    %548 = vmatpush1.bf16.msra.mxu0 %v431
    %549 = vmatprep.subr.bf16.mxu0 %v440
    %550 = vmatpush1.bf16.msra.mxu0 %v439
    %551 = vmatprep.subr.bf16.mxu0 %v448
    %552 = vmatpush1.bf16.msra.mxu0 %v447
    %553 = vmatprep.subr.bf16.mxu0 %v456
    %554 = vmatpush1.bf16.msra.mxu0 %v455
    %555 = vmatprep.subr.bf16.mxu0 %v464
    %556 = vmatpush1.bf16.msra.mxu0 %v463
    %557 = vmatprep.subr.bf16.mxu0 %v472
    %558 = vmatpush1.bf16.msra.mxu0 %v471
    %559 = vmatprep.subr.bf16.mxu0 0
    %560 = vmatpush1.bf16.msra.mxu0 0
    %561 = vmatprep.subr.bf16.mxu0 0
    %562 = vmatpush1.bf16.msra.mxu0 0
    %563 = vmatprep.subr.bf16.mxu0 0
    %564 = vmatpush1.bf16.msra.mxu0 0
    %565 = vmatprep.subr.bf16.mxu0 0
    %566 = vmatpush1.bf16.msra.mxu0 0
    %567 = vmatprep.subr.bf16.mxu0 0
    %568 = vmatpush1.bf16.msra.mxu0 0
    %569 = vmatprep.subr.bf16.mxu0 0
    %570 = vmatpush1.bf16.msra.mxu0 0
    %571 = vmatprep.subr.bf16.mxu0 0
    %572 = vmatpush1.bf16.msra.mxu0 0
    %573 = vmatprep.subr.bf16.mxu0 0
    %574 = vmatpush1.bf16.msra.mxu0 0
    %575 = vmatprep.mubr.bf16.mxu0 0
    %576 = vmatmul.mubr.bf16.gmra.mrb[0].mxu0 %v116
    %v577 = vpop.f32.mrb[0].mxu0
    %v578 = vadd.f32 %v186, %v577
    %v579 = vpop.f32.mrb[0].mxu0
    %v580 = vadd.f32 %v190, %v579
    %v581 = vpop.f32.mrb[0].mxu0
    %v582 = vadd.f32 %v186, %v581
    %v583 = vpop.f32.mrb[0].mxu0
    %v584 = vadd.f32 %v190, %v583
    %585 = vdwg.mxu0
    %586 = vmatprep.subr.bf16.mxu0 %v418
    %587 = vmatpush1.bf16.msra.mxu0 %v417
    %588 = vmatprep.subr.bf16.mxu0 %v426
    %589 = vmatpush1.bf16.msra.mxu0 %v425
    %590 = vmatprep.subr.bf16.mxu0 %v434
    %591 = vmatpush1.bf16.msra.mxu0 %v433
    %592 = vmatprep.subr.bf16.mxu0 %v442
    %593 = vmatpush1.bf16.msra.mxu0 %v441
    %594 = vmatprep.subr.bf16.mxu0 %v450
    %595 = vmatpush1.bf16.msra.mxu0 %v449
    %596 = vmatprep.subr.bf16.mxu0 %v458
    %597 = vmatpush1.bf16.msra.mxu0 %v457
    %598 = vmatprep.subr.bf16.mxu0 %v466
    %599 = vmatpush1.bf16.msra.mxu0 %v465
    %600 = vmatprep.subr.bf16.mxu0 %v474
    %601 = vmatpush1.bf16.msra.mxu0 %v473
    %602 = vmatprep.subr.bf16.mxu0 0
    %603 = vmatpush1.bf16.msra.mxu0 0
    %604 = vmatprep.subr.bf16.mxu0 0
    %605 = vmatpush1.bf16.msra.mxu0 0
    %606 = vmatprep.subr.bf16.mxu0 0
    %607 = vmatpush1.bf16.msra.mxu0 0
    %608 = vmatprep.subr.bf16.mxu0 0
    %609 = vmatpush1.bf16.msra.mxu0 0
    %610 = vmatprep.subr.bf16.mxu0 0
    %611 = vmatpush1.bf16.msra.mxu0 0
    %612 = vmatprep.subr.bf16.mxu0 0
    %613 = vmatpush1.bf16.msra.mxu0 0
    %614 = vmatprep.subr.bf16.mxu0 0
    %615 = vmatpush1.bf16.msra.mxu0 0
    %616 = vmatprep.subr.bf16.mxu0 0
    %617 = vmatpush1.bf16.msra.mxu0 0
    %618 = vmatprep.mubr.bf16.mxu0 0
    %619 = vmatmul.mubr.bf16.gmra.mrb[0].mxu0 %v116
    %v620 = vpop.f32.mrb[0].mxu0
    %v621 = vadd.f32 %v194, %v620
    %v622 = vpop.f32.mrb[0].mxu0
    %v623 = vadd.f32 %v198, %v622
    %v624 = vpop.f32.mrb[0].mxu0
    %v625 = vadd.f32 %v194, %v624
    %v626 = vpop.f32.mrb[0].mxu0
    %v627 = vadd.f32 %v198, %v626
    %628 = vdwg.mxu0
    %629 = vmatprep.subr.bf16.mxu0 %v420
    %630 = vmatpush1.bf16.msra.mxu0 %v419
    %631 = vmatprep.subr.bf16.mxu0 %v428
    %632 = vmatpush1.bf16.msra.mxu0 %v427
    %633 = vmatprep.subr.bf16.mxu0 %v436
    %634 = vmatpush1.bf16.msra.mxu0 %v435
    %635 = vmatprep.subr.bf16.mxu0 %v444
    %636 = vmatpush1.bf16.msra.mxu0 %v443
    %637 = vmatprep.subr.bf16.mxu0 %v452
    %638 = vmatpush1.bf16.msra.mxu0 %v451
    %639 = vmatprep.subr.bf16.mxu0 %v460
    %640 = vmatpush1.bf16.msra.mxu0 %v459
    %641 = vmatprep.subr.bf16.mxu0 %v468
    %642 = vmatpush1.bf16.msra.mxu0 %v467
    %643 = vmatprep.subr.bf16.mxu0 %v476
    %644 = vmatpush1.bf16.msra.mxu0 %v475
    %645 = vmatprep.subr.bf16.mxu0 0
    %646 = vmatpush1.bf16.msra.mxu0 0
    %647 = vmatprep.subr.bf16.mxu0 0
    %648 = vmatpush1.bf16.msra.mxu0 0
    %649 = vmatprep.subr.bf16.mxu0 0
    %650 = vmatpush1.bf16.msra.mxu0 0
    %651 = vmatprep.subr.bf16.mxu0 0
    %652 = vmatpush1.bf16.msra.mxu0 0
    %653 = vmatprep.subr.bf16.mxu0 0
    %654 = vmatpush1.bf16.msra.mxu0 0
    %655 = vmatprep.subr.bf16.mxu0 0
    %656 = vmatpush1.bf16.msra.mxu0 0
    %657 = vmatprep.subr.bf16.mxu0 0
    %658 = vmatpush1.bf16.msra.mxu0 0
    %659 = vmatprep.subr.bf16.mxu0 0
    %660 = vmatpush1.bf16.msra.mxu0 0
    %661 = vmatprep.mubr.bf16.mxu0 0
    %662 = vmatmul.mubr.bf16.gmra.mrb[0].mxu0 %v116
    %v663 = vpop.f32.mrb[0].mxu0
    %v664 = vadd.f32 %v202, %v663
    %v665 = vpop.f32.mrb[0].mxu0
    %v666 = vadd.f32 %v206, %v665
    %v667 = vpop.f32.mrb[0].mxu0
    %v668 = vadd.f32 %v202, %v667
    %v669 = vpop.f32.mrb[0].mxu0
    %v670 = vadd.f32 %v206, %v669
    %671 = vdwg.mxu0
    %672 = vmatprep.subr.bf16.mxu0 %v422
    %673 = vmatpush1.bf16.msra.mxu0 %v421
    %674 = vmatprep.subr.bf16.mxu0 %v430
    %675 = vmatpush1.bf16.msra.mxu0 %v429
    %676 = vmatprep.subr.bf16.mxu0 %v438
    %677 = vmatpush1.bf16.msra.mxu0 %v437
    %678 = vmatprep.subr.bf16.mxu0 %v446
    %679 = vmatpush1.bf16.msra.mxu0 %v445
    %680 = vmatprep.subr.bf16.mxu0 %v454
    %681 = vmatpush1.bf16.msra.mxu0 %v453
    %682 = vmatprep.subr.bf16.mxu0 %v462
    %683 = vmatpush1.bf16.msra.mxu0 %v461
    %684 = vmatprep.subr.bf16.mxu0 %v470
    %685 = vmatpush1.bf16.msra.mxu0 %v469
    %686 = vmatprep.subr.bf16.mxu0 %v478
    %687 = vmatpush1.bf16.msra.mxu0 %v477
    %688 = vmatprep.subr.bf16.mxu0 0
    %689 = vmatpush1.bf16.msra.mxu0 0
    %690 = vmatprep.subr.bf16.mxu0 0
    %691 = vmatpush1.bf16.msra.mxu0 0
    %692 = vmatprep.subr.bf16.mxu0 0
    %693 = vmatpush1.bf16.msra.mxu0 0
    %694 = vmatprep.subr.bf16.mxu0 0
    %695 = vmatpush1.bf16.msra.mxu0 0
    %696 = vmatprep.subr.bf16.mxu0 0
    %697 = vmatpush1.bf16.msra.mxu0 0
    %698 = vmatprep.subr.bf16.mxu0 0
    %699 = vmatpush1.bf16.msra.mxu0 0
    %700 = vmatprep.subr.bf16.mxu0 0
    %701 = vmatpush1.bf16.msra.mxu0 0
    %702 = vmatprep.subr.bf16.mxu0 0
    %703 = vmatpush1.bf16.msra.mxu0 0
    %704 = vmatprep.mubr.bf16.mxu0 0
    %705 = vmatmul.mubr.bf16.gmra.mrb[0].mxu0 %v116
    %v706 = vpop.f32.mrb[0].mxu0
    %v707 = vadd.f32 %v210, %v706
    %v708 = vpop.f32.mrb[0].mxu0
    %v709 = vadd.f32 %v214, %v708
    %v710 = vpop.f32.mrb[0].mxu0
    %v711 = vadd.f32 %v210, %v710
    %v712 = vpop.f32.mrb[0].mxu0
    %v713 = vadd.f32 %v214, %v712
    %714 = vdwg.mxu0
    %v715 = vmax.f32 %v578, 0.0
    %v716 = vmax.f32 %v580, 0.0
    %v717 = vmax.f32 %v621, 0.0
    %v718 = vmax.f32 %v623, 0.0
    %v719 = vmax.f32 %v664, 0.0
    %v720 = vmax.f32 %v666, 0.0
    %v721 = vmax.f32 %v707, 0.0
    %v722 = vmax.f32 %v709, 0.0
    %v723 = vmax.f32 %v582, 0.0
    %v724 = vmax.f32 %v584, 0.0
    %v725 = vmax.f32 %v625, 0.0
    %v726 = vmax.f32 %v627, 0.0
    %v727 = vmax.f32 %v668, 0.0
    %v728 = vmax.f32 %v670, 0.0
    %v729 = vmax.f32 %v711, 0.0
    %v730 = vmax.f32 %v713, 0.0
    %v731 = vpack.c.bf16 %v723, %v715
    %v732 = vpack.c.bf16 %v724, %v716
    %v733 = vpack.c.bf16 %v725, %v717
    %v734 = vpack.c.bf16 %v726, %v718
    %v735 = vpack.c.bf16 %v727, %v719
    %v736 = vpack.c.bf16 %v728, %v720
    %v737 = vpack.c.bf16 %v729, %v721
    %v738 = vpack.c.bf16 %v730, %v722
    %v739 = vld [vmem:[#allocation8] sm:$0xff]
    %v740 = vld [vmem:[#allocation8 + $0x8] sm:$0xff]
    %v741 = vld [vmem:[#allocation8 + $0x10] sm:$0xff]
    %v742 = vld [vmem:[#allocation8 + $0x18] sm:$0xff]
    %v743 = vld [vmem:[#allocation8 + $0x20] sm:$0xff]
    %v744 = vld [vmem:[#allocation8 + $0x28] sm:$0xff]
    %v745 = vld [vmem:[#allocation8 + $0x30] sm:$0xff]
    %v746 = vld [vmem:[#allocation8 + $0x38] sm:$0xff]
    %v747 = vld [vmem:[#allocation8 + $0x40] sm:$0xff]
    %v748 = vld [vmem:[#allocation8 + $0x48] sm:$0xff]
    %v749 = vld [vmem:[#allocation8 + $0x50] sm:$0xff]
    %v750 = vld [vmem:[#allocation8 + $0x58] sm:$0xff]
    %v751 = vld [vmem:[#allocation8 + $0x60] sm:$0xff]
    %v752 = vld [vmem:[#allocation8 + $0x68] sm:$0xff]
    %v753 = vld [vmem:[#allocation8 + $0x70] sm:$0xff]
    %v754 = vld [vmem:[#allocation8 + $0x78] sm:$0xff]
    %v755 = vld [vmem:[#allocation8 + $0x80] sm:$0xff]
    %v756 = vld [vmem:[#allocation8 + $0x88] sm:$0xff]
    %v757 = vld [vmem:[#allocation8 + $0x90] sm:$0xff]
    %v758 = vld [vmem:[#allocation8 + $0x98] sm:$0xff]
    %v759 = vld [vmem:[#allocation8 + $0xa0] sm:$0xff]
    %v760 = vld [vmem:[#allocation8 + $0xa8] sm:$0xff]
    %v761 = vld [vmem:[#allocation8 + $0xb0] sm:$0xff]
    %v762 = vld [vmem:[#allocation8 + $0xb8] sm:$0xff]
    %v763 = vld [vmem:[#allocation8 + $0xc0] sm:$0xff]
    %v764 = vld [vmem:[#allocation8 + $0xc8] sm:$0xff]
    %v765 = vld [vmem:[#allocation8 + $0xd0] sm:$0xff]
    %v766 = vld [vmem:[#allocation8 + $0xd8] sm:$0xff]
    %v767 = vld [vmem:[#allocation8 + $0xe0] sm:$0xff]
    %v768 = vld [vmem:[#allocation8 + $0xe8] sm:$0xff]
    %v769 = vld [vmem:[#allocation8 + $0xf0] sm:$0xff]
    %v770 = vld [vmem:[#allocation8 + $0xf8] sm:$0xff]
    %v771 = vld [vmem:[#allocation8 + $0x100] sm:$0xff]
    %v772 = vld [vmem:[#allocation8 + $0x108] sm:$0xff]
    %v773 = vld [vmem:[#allocation8 + $0x110] sm:$0xff]
    %v774 = vld [vmem:[#allocation8 + $0x118] sm:$0xff]
    %v775 = vld [vmem:[#allocation8 + $0x120] sm:$0xff]
    %v776 = vld [vmem:[#allocation8 + $0x128] sm:$0xff]
    %v777 = vld [vmem:[#allocation8 + $0x130] sm:$0xff]
    %v778 = vld [vmem:[#allocation8 + $0x138] sm:$0xff]
    %v779 = vld [vmem:[#allocation8 + $0x140] sm:$0xff]
    %v780 = vld [vmem:[#allocation8 + $0x148] sm:$0xff]
    %v781 = vld [vmem:[#allocation8 + $0x150] sm:$0xff]
    %v782 = vld [vmem:[#allocation8 + $0x158] sm:$0xff]
    %v783 = vld [vmem:[#allocation8 + $0x160] sm:$0xff]
    %v784 = vld [vmem:[#allocation8 + $0x168] sm:$0xff]
    %v785 = vld [vmem:[#allocation8 + $0x170] sm:$0xff]
    %v786 = vld [vmem:[#allocation8 + $0x178] sm:$0xff]
    %v787 = vld [vmem:[#allocation8 + $0x180] sm:$0xff]
    %v788 = vld [vmem:[#allocation8 + $0x188] sm:$0xff]
    %v789 = vld [vmem:[#allocation8 + $0x190] sm:$0xff]
    %v790 = vld [vmem:[#allocation8 + $0x198] sm:$0xff]
    %v791 = vld [vmem:[#allocation8 + $0x1a0] sm:$0xff]
    %v792 = vld [vmem:[#allocation8 + $0x1a8] sm:$0xff]
    %v793 = vld [vmem:[#allocation8 + $0x1b0] sm:$0xff]
    %v794 = vld [vmem:[#allocation8 + $0x1b8] sm:$0xff]
    %v795 = vld [vmem:[#allocation8 + $0x1c0] sm:$0xff]
    %v796 = vld [vmem:[#allocation8 + $0x1c8] sm:$0xff]
    %v797 = vld [vmem:[#allocation8 + $0x1d0] sm:$0xff]
    %v798 = vld [vmem:[#allocation8 + $0x1d8] sm:$0xff]
    %v799 = vld [vmem:[#allocation8 + $0x1e0] sm:$0xff]
    %v800 = vld [vmem:[#allocation8 + $0x1e8] sm:$0xff]
    %v801 = vld [vmem:[#allocation8 + $0x1f0] sm:$0xff]
    %v802 = vld [vmem:[#allocation8 + $0x1f8] sm:$0xff]
    %v803 = vld [vmem:[#allocation8 + $0x200] sm:$0xff]
    %v804 = vld [vmem:[#allocation8 + $0x208] sm:$0xff]
    %v805 = vld [vmem:[#allocation8 + $0x210] sm:$0xff]
    %v806 = vld [vmem:[#allocation8 + $0x218] sm:$0xff]
    %v807 = vld [vmem:[#allocation8 + $0x220] sm:$0xff]
    %v808 = vld [vmem:[#allocation8 + $0x228] sm:$0xff]
    %v809 = vld [vmem:[#allocation8 + $0x230] sm:$0xff]
    %v810 = vld [vmem:[#allocation8 + $0x238] sm:$0xff]
    %v811 = vld [vmem:[#allocation8 + $0x240] sm:$0xff]
    %v812 = vld [vmem:[#allocation8 + $0x248] sm:$0xff]
    %v813 = vld [vmem:[#allocation8 + $0x250] sm:$0xff]
    %v814 = vld [vmem:[#allocation8 + $0x258] sm:$0xff]
    %v815 = vld [vmem:[#allocation8 + $0x260] sm:$0xff]
    %v816 = vld [vmem:[#allocation8 + $0x268] sm:$0xff]
    %v817 = vld [vmem:[#allocation8 + $0x270] sm:$0xff]
    %v818 = vld [vmem:[#allocation8 + $0x278] sm:$0xff]
    %v819 = vld [vmem:[#allocation8 + $0x280] sm:$0xff]
    %v820 = vld [vmem:[#allocation8 + $0x288] sm:$0xff]
    %v821 = vld [vmem:[#allocation8 + $0x290] sm:$0xff]
    %v822 = vld [vmem:[#allocation8 + $0x298] sm:$0xff]
    %v823 = vld [vmem:[#allocation8 + $0x2a0] sm:$0xff]
    %v824 = vld [vmem:[#allocation8 + $0x2a8] sm:$0xff]
    %v825 = vld [vmem:[#allocation8 + $0x2b0] sm:$0xff]
    %v826 = vld [vmem:[#allocation8 + $0x2b8] sm:$0xff]
    %v827 = vld [vmem:[#allocation8 + $0x2c0] sm:$0xff]
    %v828 = vld [vmem:[#allocation8 + $0x2c8] sm:$0xff]
    %v829 = vld [vmem:[#allocation8 + $0x2d0] sm:$0xff]
    %v830 = vld [vmem:[#allocation8 + $0x2d8] sm:$0xff]
    %v831 = vld [vmem:[#allocation8 + $0x2e0] sm:$0xff]
    %v832 = vld [vmem:[#allocation8 + $0x2e8] sm:$0xff]
    %v833 = vld [vmem:[#allocation8 + $0x2f0] sm:$0xff]
    %v834 = vld [vmem:[#allocation8 + $0x2f8] sm:$0xff]
    %v835 = vld [vmem:[#allocation8 + $0x300] sm:$0xff]
    %v836 = vld [vmem:[#allocation8 + $0x308] sm:$0xff]
    %v837 = vld [vmem:[#allocation8 + $0x310] sm:$0xff]
    %v838 = vld [vmem:[#allocation8 + $0x318] sm:$0xff]
    %v839 = vld [vmem:[#allocation8 + $0x320] sm:$0xff]
    %v840 = vld [vmem:[#allocation8 + $0x328] sm:$0xff]
    %v841 = vld [vmem:[#allocation8 + $0x330] sm:$0xff]
    %v842 = vld [vmem:[#allocation8 + $0x338] sm:$0xff]
    %v843 = vld [vmem:[#allocation8 + $0x340] sm:$0xff]
    %v844 = vld [vmem:[#allocation8 + $0x348] sm:$0xff]
    %v845 = vld [vmem:[#allocation8 + $0x350] sm:$0xff]
    %v846 = vld [vmem:[#allocation8 + $0x358] sm:$0xff]
    %v847 = vld [vmem:[#allocation8 + $0x360] sm:$0xff]
    %v848 = vld [vmem:[#allocation8 + $0x368] sm:$0xff]
    %v849 = vld [vmem:[#allocation8 + $0x370] sm:$0xff]
    %v850 = vld [vmem:[#allocation8 + $0x378] sm:$0xff]
    %v851 = vld [vmem:[#allocation8 + $0x380] sm:$0xff]
    %v852 = vld [vmem:[#allocation8 + $0x388] sm:$0xff]
    %v853 = vld [vmem:[#allocation8 + $0x390] sm:$0xff]
    %v854 = vld [vmem:[#allocation8 + $0x398] sm:$0xff]
    %v855 = vld [vmem:[#allocation8 + $0x3a0] sm:$0xff]
    %v856 = vld [vmem:[#allocation8 + $0x3a8] sm:$0xff]
    %v857 = vld [vmem:[#allocation8 + $0x3b0] sm:$0xff]
    %v858 = vld [vmem:[#allocation8 + $0x3b8] sm:$0xff]
    %v859 = vld [vmem:[#allocation8 + $0x3c0] sm:$0xff]
    %v860 = vld [vmem:[#allocation8 + $0x3c8] sm:$0xff]
    %v861 = vld [vmem:[#allocation8 + $0x3d0] sm:$0xff]
    %v862 = vld [vmem:[#allocation8 + $0x3d8] sm:$0xff]
    %v863 = vld [vmem:[#allocation8 + $0x3e0] sm:$0xff]
    %v864 = vld [vmem:[#allocation8 + $0x3e8] sm:$0xff]
    %v865 = vld [vmem:[#allocation8 + $0x3f0] sm:$0xff]
    %v866 = vld [vmem:[#allocation8 + $0x3f8] sm:$0xff]
    %v867 = vld [vmem:[#allocation8 + $0x400] sm:$0xff]
    %v868 = vld [vmem:[#allocation8 + $0x408] sm:$0xff]
    %v869 = vld [vmem:[#allocation8 + $0x410] sm:$0xff]
    %v870 = vld [vmem:[#allocation8 + $0x418] sm:$0xff]
    %v871 = vld [vmem:[#allocation8 + $0x420] sm:$0xff]
    %v872 = vld [vmem:[#allocation8 + $0x428] sm:$0xff]
    %v873 = vld [vmem:[#allocation8 + $0x430] sm:$0xff]
    %v874 = vld [vmem:[#allocation8 + $0x438] sm:$0xff]
    %v875 = vld [vmem:[#allocation8 + $0x440] sm:$0xff]
    %v876 = vld [vmem:[#allocation8 + $0x448] sm:$0xff]
    %v877 = vld [vmem:[#allocation8 + $0x450] sm:$0xff]
    %v878 = vld [vmem:[#allocation8 + $0x458] sm:$0xff]
    %v879 = vld [vmem:[#allocation8 + $0x460] sm:$0xff]
    %v880 = vld [vmem:[#allocation8 + $0x468] sm:$0xff]
    %v881 = vld [vmem:[#allocation8 + $0x470] sm:$0xff]
    %v882 = vld [vmem:[#allocation8 + $0x478] sm:$0xff]
    %v883 = vld [vmem:[#allocation8 + $0x480] sm:$0xff]
    %v884 = vld [vmem:[#allocation8 + $0x488] sm:$0xff]
    %v885 = vld [vmem:[#allocation8 + $0x490] sm:$0xff]
    %v886 = vld [vmem:[#allocation8 + $0x498] sm:$0xff]
    %v887 = vld [vmem:[#allocation8 + $0x4a0] sm:$0xff]
    %v888 = vld [vmem:[#allocation8 + $0x4a8] sm:$0xff]
    %v889 = vld [vmem:[#allocation8 + $0x4b0] sm:$0xff]
    %v890 = vld [vmem:[#allocation8 + $0x4b8] sm:$0xff]
    %v891 = vld [vmem:[#allocation8 + $0x4c0] sm:$0xff]
    %v892 = vld [vmem:[#allocation8 + $0x4c8] sm:$0xff]
    %v893 = vld [vmem:[#allocation8 + $0x4d0] sm:$0xff]
    %v894 = vld [vmem:[#allocation8 + $0x4d8] sm:$0xff]
    %v895 = vld [vmem:[#allocation8 + $0x4e0] sm:$0xff]
    %v896 = vld [vmem:[#allocation8 + $0x4e8] sm:$0xff]
    %v897 = vld [vmem:[#allocation8 + $0x4f0] sm:$0xff]
    %v898 = vld [vmem:[#allocation8 + $0x4f8] sm:$0xff]
    %v899 = vld [vmem:[#allocation8 + $0x500] sm:$0xff]
    %v900 = vld [vmem:[#allocation8 + $0x508] sm:$0xff]
    %v901 = vld [vmem:[#allocation8 + $0x510] sm:$0xff]
    %v902 = vld [vmem:[#allocation8 + $0x518] sm:$0xff]
    %v903 = vld [vmem:[#allocation8 + $0x520] sm:$0xff]
    %v904 = vld [vmem:[#allocation8 + $0x528] sm:$0xff]
    %v905 = vld [vmem:[#allocation8 + $0x530] sm:$0xff]
    %v906 = vld [vmem:[#allocation8 + $0x538] sm:$0xff]
    %v907 = vld [vmem:[#allocation8 + $0x540] sm:$0xff]
    %v908 = vld [vmem:[#allocation8 + $0x548] sm:$0xff]
    %v909 = vld [vmem:[#allocation8 + $0x550] sm:$0xff]
    %v910 = vld [vmem:[#allocation8 + $0x558] sm:$0xff]
    %v911 = vld [vmem:[#allocation8 + $0x560] sm:$0xff]
    %v912 = vld [vmem:[#allocation8 + $0x568] sm:$0xff]
    %v913 = vld [vmem:[#allocation8 + $0x570] sm:$0xff]
    %v914 = vld [vmem:[#allocation8 + $0x578] sm:$0xff]
    %v915 = vld [vmem:[#allocation8 + $0x580] sm:$0xff]
    %v916 = vld [vmem:[#allocation8 + $0x588] sm:$0xff]
    %v917 = vld [vmem:[#allocation8 + $0x590] sm:$0xff]
    %v918 = vld [vmem:[#allocation8 + $0x598] sm:$0xff]
    %v919 = vld [vmem:[#allocation8 + $0x5a0] sm:$0xff]
    %v920 = vld [vmem:[#allocation8 + $0x5a8] sm:$0xff]
    %v921 = vld [vmem:[#allocation8 + $0x5b0] sm:$0xff]
    %v922 = vld [vmem:[#allocation8 + $0x5b8] sm:$0xff]
    %v923 = vld [vmem:[#allocation8 + $0x5c0] sm:$0xff]
    %v924 = vld [vmem:[#allocation8 + $0x5c8] sm:$0xff]
    %v925 = vld [vmem:[#allocation8 + $0x5d0] sm:$0xff]
    %v926 = vld [vmem:[#allocation8 + $0x5d8] sm:$0xff]
    %v927 = vld [vmem:[#allocation8 + $0x5e0] sm:$0xff]
    %v928 = vld [vmem:[#allocation8 + $0x5e8] sm:$0xff]
    %v929 = vld [vmem:[#allocation8 + $0x5f0] sm:$0xff]
    %v930 = vld [vmem:[#allocation8 + $0x5f8] sm:$0xff]
    %v931 = vld [vmem:[#allocation8 + $0x600] sm:$0xff]
    %v932 = vld [vmem:[#allocation8 + $0x608] sm:$0xff]
    %v933 = vld [vmem:[#allocation8 + $0x610] sm:$0xff]
    %v934 = vld [vmem:[#allocation8 + $0x618] sm:$0xff]
    %v935 = vld [vmem:[#allocation8 + $0x620] sm:$0xff]
    %v936 = vld [vmem:[#allocation8 + $0x628] sm:$0xff]
    %v937 = vld [vmem:[#allocation8 + $0x630] sm:$0xff]
    %v938 = vld [vmem:[#allocation8 + $0x638] sm:$0xff]
    %v939 = vld [vmem:[#allocation8 + $0x640] sm:$0xff]
    %v940 = vld [vmem:[#allocation8 + $0x648] sm:$0xff]
    %v941 = vld [vmem:[#allocation8 + $0x650] sm:$0xff]
    %v942 = vld [vmem:[#allocation8 + $0x658] sm:$0xff]
    %v943 = vld [vmem:[#allocation8 + $0x660] sm:$0xff]
    %v944 = vld [vmem:[#allocation8 + $0x668] sm:$0xff]
    %v945 = vld [vmem:[#allocation8 + $0x670] sm:$0xff]
    %v946 = vld [vmem:[#allocation8 + $0x678] sm:$0xff]
    %v947 = vld [vmem:[#allocation8 + $0x680] sm:$0xff]
    %v948 = vld [vmem:[#allocation8 + $0x688] sm:$0xff]
    %v949 = vld [vmem:[#allocation8 + $0x690] sm:$0xff]
    %v950 = vld [vmem:[#allocation8 + $0x698] sm:$0xff]
    %v951 = vld [vmem:[#allocation8 + $0x6a0] sm:$0xff]
    %v952 = vld [vmem:[#allocation8 + $0x6a8] sm:$0xff]
    %v953 = vld [vmem:[#allocation8 + $0x6b0] sm:$0xff]
    %v954 = vld [vmem:[#allocation8 + $0x6b8] sm:$0xff]
    %v955 = vld [vmem:[#allocation8 + $0x6c0] sm:$0xff]
    %v956 = vld [vmem:[#allocation8 + $0x6c8] sm:$0xff]
    %v957 = vld [vmem:[#allocation8 + $0x6d0] sm:$0xff]
    %v958 = vld [vmem:[#allocation8 + $0x6d8] sm:$0xff]
    %v959 = vld [vmem:[#allocation8 + $0x6e0] sm:$0xff]
    %v960 = vld [vmem:[#allocation8 + $0x6e8] sm:$0xff]
    %v961 = vld [vmem:[#allocation8 + $0x6f0] sm:$0xff]
    %v962 = vld [vmem:[#allocation8 + $0x6f8] sm:$0xff]
    %v963 = vld [vmem:[#allocation8 + $0x700] sm:$0xff]
    %v964 = vld [vmem:[#allocation8 + $0x708] sm:$0xff]
    %v965 = vld [vmem:[#allocation8 + $0x710] sm:$0xff]
    %v966 = vld [vmem:[#allocation8 + $0x718] sm:$0xff]
    %v967 = vld [vmem:[#allocation8 + $0x720] sm:$0xff]
    %v968 = vld [vmem:[#allocation8 + $0x728] sm:$0xff]
    %v969 = vld [vmem:[#allocation8 + $0x730] sm:$0xff]
    %v970 = vld [vmem:[#allocation8 + $0x738] sm:$0xff]
    %v971 = vld [vmem:[#allocation8 + $0x740] sm:$0xff]
    %v972 = vld [vmem:[#allocation8 + $0x748] sm:$0xff]
    %v973 = vld [vmem:[#allocation8 + $0x750] sm:$0xff]
    %v974 = vld [vmem:[#allocation8 + $0x758] sm:$0xff]
    %v975 = vld [vmem:[#allocation8 + $0x760] sm:$0xff]
    %v976 = vld [vmem:[#allocation8 + $0x768] sm:$0xff]
    %v977 = vld [vmem:[#allocation8 + $0x770] sm:$0xff]
    %v978 = vld [vmem:[#allocation8 + $0x778] sm:$0xff]
    %v979 = vld [vmem:[#allocation8 + $0x780] sm:$0xff]
    %v980 = vld [vmem:[#allocation8 + $0x788] sm:$0xff]
    %v981 = vld [vmem:[#allocation8 + $0x790] sm:$0xff]
    %v982 = vld [vmem:[#allocation8 + $0x798] sm:$0xff]
    %v983 = vld [vmem:[#allocation8 + $0x7a0] sm:$0xff]
    %v984 = vld [vmem:[#allocation8 + $0x7a8] sm:$0xff]
    %v985 = vld [vmem:[#allocation8 + $0x7b0] sm:$0xff]
    %v986 = vld [vmem:[#allocation8 + $0x7b8] sm:$0xff]
    %v987 = vld [vmem:[#allocation8 + $0x7c0] sm:$0xff]
    %v988 = vld [vmem:[#allocation8 + $0x7c8] sm:$0xff]
    %v989 = vld [vmem:[#allocation8 + $0x7d0] sm:$0xff]
    %v990 = vld [vmem:[#allocation8 + $0x7d8] sm:$0xff]
    %v991 = vld [vmem:[#allocation8 + $0x7e0] sm:$0xff]
    %v992 = vld [vmem:[#allocation8 + $0x7e8] sm:$0xff]
    %v993 = vld [vmem:[#allocation8 + $0x7f0] sm:$0xff]
    %v994 = vld [vmem:[#allocation8 + $0x7f8] sm:$0xff]
    %v995 = vld [vmem:[%s4] sm:$0xf]
    %v997 = vlaneseq
    %v998 = vshrl.u32 %v997, 7
    %v999 = vsub.s32 0, %v998
    %v1000 = vrot.slane %v995, %v999
    %v1001 = vlaneseq
    %v1002 = vshrl.u32 %v1001, 7
    %v1003 = vsub.s32 1, %v1002
    %v1004 = vrot.slane %v995, %v1003
    %v1005 = vlaneseq
    %v1006 = vshrl.u32 %v1005, 7
    %v1007 = vsub.s32 2, %v1006
    %v1008 = vrot.slane %v995, %v1007
    %v1009 = vlaneseq
    %v1010 = vshrl.u32 %v1009, 7
    %v1011 = vsub.s32 3, %v1010
    %v1012 = vrot.slane %v995, %v1011
    %v1273 = vunpack.c.l.b16 %v739
    %v1274 = vunpack.c.h.b16 %v739
    %v1275 = vunpack.c.l.b16 %v740
    %v1276 = vunpack.c.h.b16 %v740
    %v1277 = vunpack.c.l.b16 %v741
    %v1278 = vunpack.c.h.b16 %v741
    %v1279 = vunpack.c.l.b16 %v742
    %v1280 = vunpack.c.h.b16 %v742
    %v1281 = vunpack.c.l.b16 %v743
    %v1282 = vunpack.c.h.b16 %v743
    %v1283 = vunpack.c.l.b16 %v744
    %v1284 = vunpack.c.h.b16 %v744
    %v1285 = vunpack.c.l.b16 %v745
    %v1286 = vunpack.c.h.b16 %v745
    %v1287 = vunpack.c.l.b16 %v746
    %v1288 = vunpack.c.h.b16 %v746
    %v1289 = vunpack.c.l.b16 %v747
    %v1290 = vunpack.c.h.b16 %v747
    %v1291 = vunpack.c.l.b16 %v748
    %v1292 = vunpack.c.h.b16 %v748
    %v1293 = vunpack.c.l.b16 %v749
    %v1294 = vunpack.c.h.b16 %v749
    %v1295 = vunpack.c.l.b16 %v750
    %v1296 = vunpack.c.h.b16 %v750
    %v1297 = vunpack.c.l.b16 %v751
    %v1298 = vunpack.c.h.b16 %v751
    %v1299 = vunpack.c.l.b16 %v752
    %v1300 = vunpack.c.h.b16 %v752
    %v1301 = vunpack.c.l.b16 %v753
    %v1302 = vunpack.c.h.b16 %v753
    %v1303 = vunpack.c.l.b16 %v754
    %v1304 = vunpack.c.h.b16 %v754
    %v1305 = vunpack.c.l.b16 %v755
    %v1306 = vunpack.c.h.b16 %v755
    %v1307 = vunpack.c.l.b16 %v756
    %v1308 = vunpack.c.h.b16 %v756
    %v1309 = vunpack.c.l.b16 %v757
    %v1310 = vunpack.c.h.b16 %v757
    %v1311 = vunpack.c.l.b16 %v758
    %v1312 = vunpack.c.h.b16 %v758
    %v1313 = vunpack.c.l.b16 %v759
    %v1314 = vunpack.c.h.b16 %v759
    %v1315 = vunpack.c.l.b16 %v760
    %v1316 = vunpack.c.h.b16 %v760
    %v1317 = vunpack.c.l.b16 %v761
    %v1318 = vunpack.c.h.b16 %v761
    %v1319 = vunpack.c.l.b16 %v762
    %v1320 = vunpack.c.h.b16 %v762
    %v1321 = vunpack.c.l.b16 %v763
    %v1322 = vunpack.c.h.b16 %v763
    %v1323 = vunpack.c.l.b16 %v764
    %v1324 = vunpack.c.h.b16 %v764
    %v1325 = vunpack.c.l.b16 %v765
    %v1326 = vunpack.c.h.b16 %v765
    %v1327 = vunpack.c.l.b16 %v766
    %v1328 = vunpack.c.h.b16 %v766
    %v1329 = vunpack.c.l.b16 %v767
    %v1330 = vunpack.c.h.b16 %v767
    %v1331 = vunpack.c.l.b16 %v768
    %v1332 = vunpack.c.h.b16 %v768
    %v1333 = vunpack.c.l.b16 %v769
    %v1334 = vunpack.c.h.b16 %v769
    %v1335 = vunpack.c.l.b16 %v770
    %v1336 = vunpack.c.h.b16 %v770
    %v1337 = vunpack.c.l.b16 %v771
    %v1338 = vunpack.c.h.b16 %v771
    %v1339 = vunpack.c.l.b16 %v772
    %v1340 = vunpack.c.h.b16 %v772
    %v1341 = vunpack.c.l.b16 %v773
    %v1342 = vunpack.c.h.b16 %v773
    %v1343 = vunpack.c.l.b16 %v774
    %v1344 = vunpack.c.h.b16 %v774
    %v1345 = vunpack.c.l.b16 %v775
    %v1346 = vunpack.c.h.b16 %v775
    %v1347 = vunpack.c.l.b16 %v776
    %v1348 = vunpack.c.h.b16 %v776
    %v1349 = vunpack.c.l.b16 %v777
    %v1350 = vunpack.c.h.b16 %v777
    %v1351 = vunpack.c.l.b16 %v778
    %v1352 = vunpack.c.h.b16 %v778
    %v1353 = vunpack.c.l.b16 %v779
    %v1354 = vunpack.c.h.b16 %v779
    %v1355 = vunpack.c.l.b16 %v780
    %v1356 = vunpack.c.h.b16 %v780
    %v1357 = vunpack.c.l.b16 %v781
    %v1358 = vunpack.c.h.b16 %v781
    %v1359 = vunpack.c.l.b16 %v782
    %v1360 = vunpack.c.h.b16 %v782
    %v1361 = vunpack.c.l.b16 %v783
    %v1362 = vunpack.c.h.b16 %v783
    %v1363 = vunpack.c.l.b16 %v784
    %v1364 = vunpack.c.h.b16 %v784
    %v1365 = vunpack.c.l.b16 %v785
    %v1366 = vunpack.c.h.b16 %v785
    %v1367 = vunpack.c.l.b16 %v786
    %v1368 = vunpack.c.h.b16 %v786
    %v1369 = vunpack.c.l.b16 %v787
    %v1370 = vunpack.c.h.b16 %v787
    %v1371 = vunpack.c.l.b16 %v788
    %v1372 = vunpack.c.h.b16 %v788
    %v1373 = vunpack.c.l.b16 %v789
    %v1374 = vunpack.c.h.b16 %v789
    %v1375 = vunpack.c.l.b16 %v790
    %v1376 = vunpack.c.h.b16 %v790
    %v1377 = vunpack.c.l.b16 %v791
    %v1378 = vunpack.c.h.b16 %v791
    %v1379 = vunpack.c.l.b16 %v792
    %v1380 = vunpack.c.h.b16 %v792
    %v1381 = vunpack.c.l.b16 %v793
    %v1382 = vunpack.c.h.b16 %v793
    %v1383 = vunpack.c.l.b16 %v794
    %v1384 = vunpack.c.h.b16 %v794
    %v1385 = vunpack.c.l.b16 %v795
    %v1386 = vunpack.c.h.b16 %v795
    %v1387 = vunpack.c.l.b16 %v796
    %v1388 = vunpack.c.h.b16 %v796
    %v1389 = vunpack.c.l.b16 %v797
    %v1390 = vunpack.c.h.b16 %v797
    %v1391 = vunpack.c.l.b16 %v798
    %v1392 = vunpack.c.h.b16 %v798
    %v1393 = vunpack.c.l.b16 %v799
    %v1394 = vunpack.c.h.b16 %v799
    %v1395 = vunpack.c.l.b16 %v800
    %v1396 = vunpack.c.h.b16 %v800
    %v1397 = vunpack.c.l.b16 %v801
    %v1398 = vunpack.c.h.b16 %v801
    %v1399 = vunpack.c.l.b16 %v802
    %v1400 = vunpack.c.h.b16 %v802
    %v1401 = vunpack.c.l.b16 %v803
    %v1402 = vunpack.c.h.b16 %v803
    %v1403 = vunpack.c.l.b16 %v804
    %v1404 = vunpack.c.h.b16 %v804
    %v1405 = vunpack.c.l.b16 %v805
    %v1406 = vunpack.c.h.b16 %v805
    %v1407 = vunpack.c.l.b16 %v806
    %v1408 = vunpack.c.h.b16 %v806
    %v1409 = vunpack.c.l.b16 %v807
    %v1410 = vunpack.c.h.b16 %v807
    %v1411 = vunpack.c.l.b16 %v808
    %v1412 = vunpack.c.h.b16 %v808
    %v1413 = vunpack.c.l.b16 %v809
    %v1414 = vunpack.c.h.b16 %v809
    %v1415 = vunpack.c.l.b16 %v810
    %v1416 = vunpack.c.h.b16 %v810
    %v1417 = vunpack.c.l.b16 %v811
    %v1418 = vunpack.c.h.b16 %v811
    %v1419 = vunpack.c.l.b16 %v812
    %v1420 = vunpack.c.h.b16 %v812
    %v1421 = vunpack.c.l.b16 %v813
    %v1422 = vunpack.c.h.b16 %v813
    %v1423 = vunpack.c.l.b16 %v814
    %v1424 = vunpack.c.h.b16 %v814
    %v1425 = vunpack.c.l.b16 %v815
    %v1426 = vunpack.c.h.b16 %v815
    %v1427 = vunpack.c.l.b16 %v816
    %v1428 = vunpack.c.h.b16 %v816
    %v1429 = vunpack.c.l.b16 %v817
    %v1430 = vunpack.c.h.b16 %v817
    %v1431 = vunpack.c.l.b16 %v818
    %v1432 = vunpack.c.h.b16 %v818
    %v1433 = vunpack.c.l.b16 %v819
    %v1434 = vunpack.c.h.b16 %v819
    %v1435 = vunpack.c.l.b16 %v820
    %v1436 = vunpack.c.h.b16 %v820
    %v1437 = vunpack.c.l.b16 %v821
    %v1438 = vunpack.c.h.b16 %v821
    %v1439 = vunpack.c.l.b16 %v822
    %v1440 = vunpack.c.h.b16 %v822
    %v1441 = vunpack.c.l.b16 %v823
    %v1442 = vunpack.c.h.b16 %v823
    %v1443 = vunpack.c.l.b16 %v824
    %v1444 = vunpack.c.h.b16 %v824
    %v1445 = vunpack.c.l.b16 %v825
    %v1446 = vunpack.c.h.b16 %v825
    %v1447 = vunpack.c.l.b16 %v826
    %v1448 = vunpack.c.h.b16 %v826
    %v1449 = vunpack.c.l.b16 %v827
    %v1450 = vunpack.c.h.b16 %v827
    %v1451 = vunpack.c.l.b16 %v828
    %v1452 = vunpack.c.h.b16 %v828
    %v1453 = vunpack.c.l.b16 %v829
    %v1454 = vunpack.c.h.b16 %v829
    %v1455 = vunpack.c.l.b16 %v830
    %v1456 = vunpack.c.h.b16 %v830
    %v1457 = vunpack.c.l.b16 %v831
    %v1458 = vunpack.c.h.b16 %v831
    %v1459 = vunpack.c.l.b16 %v832
    %v1460 = vunpack.c.h.b16 %v832
    %v1461 = vunpack.c.l.b16 %v833
    %v1462 = vunpack.c.h.b16 %v833
    %v1463 = vunpack.c.l.b16 %v834
    %v1464 = vunpack.c.h.b16 %v834
    %v1465 = vunpack.c.l.b16 %v835
    %v1466 = vunpack.c.h.b16 %v835
    %v1467 = vunpack.c.l.b16 %v836
    %v1468 = vunpack.c.h.b16 %v836
    %v1469 = vunpack.c.l.b16 %v837
    %v1470 = vunpack.c.h.b16 %v837
    %v1471 = vunpack.c.l.b16 %v838
    %v1472 = vunpack.c.h.b16 %v838
    %v1473 = vunpack.c.l.b16 %v839
    %v1474 = vunpack.c.h.b16 %v839
    %v1475 = vunpack.c.l.b16 %v840
    %v1476 = vunpack.c.h.b16 %v840
    %v1477 = vunpack.c.l.b16 %v841
    %v1478 = vunpack.c.h.b16 %v841
    %v1479 = vunpack.c.l.b16 %v842
    %v1480 = vunpack.c.h.b16 %v842
    %v1481 = vunpack.c.l.b16 %v843
    %v1482 = vunpack.c.h.b16 %v843
    %v1483 = vunpack.c.l.b16 %v844
    %v1484 = vunpack.c.h.b16 %v844
    %v1485 = vunpack.c.l.b16 %v845
    %v1486 = vunpack.c.h.b16 %v845
    %v1487 = vunpack.c.l.b16 %v846
    %v1488 = vunpack.c.h.b16 %v846
    %v1489 = vunpack.c.l.b16 %v847
    %v1490 = vunpack.c.h.b16 %v847
    %v1491 = vunpack.c.l.b16 %v848
    %v1492 = vunpack.c.h.b16 %v848
    %v1493 = vunpack.c.l.b16 %v849
    %v1494 = vunpack.c.h.b16 %v849
    %v1495 = vunpack.c.l.b16 %v850
    %v1496 = vunpack.c.h.b16 %v850
    %v1497 = vunpack.c.l.b16 %v851
    %v1498 = vunpack.c.h.b16 %v851
    %v1499 = vunpack.c.l.b16 %v852
    %v1500 = vunpack.c.h.b16 %v852
    %v1501 = vunpack.c.l.b16 %v853
    %v1502 = vunpack.c.h.b16 %v853
    %v1503 = vunpack.c.l.b16 %v854
    %v1504 = vunpack.c.h.b16 %v854
    %v1505 = vunpack.c.l.b16 %v855
    %v1506 = vunpack.c.h.b16 %v855
    %v1507 = vunpack.c.l.b16 %v856
    %v1508 = vunpack.c.h.b16 %v856
    %v1509 = vunpack.c.l.b16 %v857
    %v1510 = vunpack.c.h.b16 %v857
    %v1511 = vunpack.c.l.b16 %v858
    %v1512 = vunpack.c.h.b16 %v858
    %v1513 = vunpack.c.l.b16 %v859
    %v1514 = vunpack.c.h.b16 %v859
    %v1515 = vunpack.c.l.b16 %v860
    %v1516 = vunpack.c.h.b16 %v860
    %v1517 = vunpack.c.l.b16 %v861
    %v1518 = vunpack.c.h.b16 %v861
    %v1519 = vunpack.c.l.b16 %v862
    %v1520 = vunpack.c.h.b16 %v862
    %v1521 = vunpack.c.l.b16 %v863
    %v1522 = vunpack.c.h.b16 %v863
    %v1523 = vunpack.c.l.b16 %v864
    %v1524 = vunpack.c.h.b16 %v864
    %v1525 = vunpack.c.l.b16 %v865
    %v1526 = vunpack.c.h.b16 %v865
    %v1527 = vunpack.c.l.b16 %v866
    %v1528 = vunpack.c.h.b16 %v866
    %v1529 = vunpack.c.l.b16 %v867
    %v1530 = vunpack.c.h.b16 %v867
    %v1531 = vunpack.c.l.b16 %v868
    %v1532 = vunpack.c.h.b16 %v868
    %v1533 = vunpack.c.l.b16 %v869
    %v1534 = vunpack.c.h.b16 %v869
    %v1535 = vunpack.c.l.b16 %v870
    %v1536 = vunpack.c.h.b16 %v870
    %v1537 = vunpack.c.l.b16 %v871
    %v1538 = vunpack.c.h.b16 %v871
    %v1539 = vunpack.c.l.b16 %v872
    %v1540 = vunpack.c.h.b16 %v872
    %v1541 = vunpack.c.l.b16 %v873
    %v1542 = vunpack.c.h.b16 %v873
    %v1543 = vunpack.c.l.b16 %v874
    %v1544 = vunpack.c.h.b16 %v874
    %v1545 = vunpack.c.l.b16 %v875
    %v1546 = vunpack.c.h.b16 %v875
    %v1547 = vunpack.c.l.b16 %v876
    %v1548 = vunpack.c.h.b16 %v876
    %v1549 = vunpack.c.l.b16 %v877
    %v1550 = vunpack.c.h.b16 %v877
    %v1551 = vunpack.c.l.b16 %v878
    %v1552 = vunpack.c.h.b16 %v878
    %v1553 = vunpack.c.l.b16 %v879
    %v1554 = vunpack.c.h.b16 %v879
    %v1555 = vunpack.c.l.b16 %v880
    %v1556 = vunpack.c.h.b16 %v880
    %v1557 = vunpack.c.l.b16 %v881
    %v1558 = vunpack.c.h.b16 %v881
    %v1559 = vunpack.c.l.b16 %v882
    %v1560 = vunpack.c.h.b16 %v882
    %v1561 = vunpack.c.l.b16 %v883
    %v1562 = vunpack.c.h.b16 %v883
    %v1563 = vunpack.c.l.b16 %v884
    %v1564 = vunpack.c.h.b16 %v884
    %v1565 = vunpack.c.l.b16 %v885
    %v1566 = vunpack.c.h.b16 %v885
    %v1567 = vunpack.c.l.b16 %v886
    %v1568 = vunpack.c.h.b16 %v886
    %v1569 = vunpack.c.l.b16 %v887
    %v1570 = vunpack.c.h.b16 %v887
    %v1571 = vunpack.c.l.b16 %v888
    %v1572 = vunpack.c.h.b16 %v888
    %v1573 = vunpack.c.l.b16 %v889
    %v1574 = vunpack.c.h.b16 %v889
    %v1575 = vunpack.c.l.b16 %v890
    %v1576 = vunpack.c.h.b16 %v890
    %v1577 = vunpack.c.l.b16 %v891
    %v1578 = vunpack.c.h.b16 %v891
    %v1579 = vunpack.c.l.b16 %v892
    %v1580 = vunpack.c.h.b16 %v892
    %v1581 = vunpack.c.l.b16 %v893
    %v1582 = vunpack.c.h.b16 %v893
    %v1583 = vunpack.c.l.b16 %v894
    %v1584 = vunpack.c.h.b16 %v894
    %v1585 = vunpack.c.l.b16 %v895
    %v1586 = vunpack.c.h.b16 %v895
    %v1587 = vunpack.c.l.b16 %v896
    %v1588 = vunpack.c.h.b16 %v896
    %v1589 = vunpack.c.l.b16 %v897
    %v1590 = vunpack.c.h.b16 %v897
    %v1591 = vunpack.c.l.b16 %v898
    %v1592 = vunpack.c.h.b16 %v898
    %v1593 = vunpack.c.l.b16 %v899
    %v1594 = vunpack.c.h.b16 %v899
    %v1595 = vunpack.c.l.b16 %v900
    %v1596 = vunpack.c.h.b16 %v900
    %v1597 = vunpack.c.l.b16 %v901
    %v1598 = vunpack.c.h.b16 %v901
    %v1599 = vunpack.c.l.b16 %v902
    %v1600 = vunpack.c.h.b16 %v902
    %v1601 = vunpack.c.l.b16 %v903
    %v1602 = vunpack.c.h.b16 %v903
    %v1603 = vunpack.c.l.b16 %v904
    %v1604 = vunpack.c.h.b16 %v904
    %v1605 = vunpack.c.l.b16 %v905
    %v1606 = vunpack.c.h.b16 %v905
    %v1607 = vunpack.c.l.b16 %v906
    %v1608 = vunpack.c.h.b16 %v906
    %v1609 = vunpack.c.l.b16 %v907
    %v1610 = vunpack.c.h.b16 %v907
    %v1611 = vunpack.c.l.b16 %v908
    %v1612 = vunpack.c.h.b16 %v908
    %v1613 = vunpack.c.l.b16 %v909
    %v1614 = vunpack.c.h.b16 %v909
    %v1615 = vunpack.c.l.b16 %v910
    %v1616 = vunpack.c.h.b16 %v910
    %v1617 = vunpack.c.l.b16 %v911
    %v1618 = vunpack.c.h.b16 %v911
    %v1619 = vunpack.c.l.b16 %v912
    %v1620 = vunpack.c.h.b16 %v912
    %v1621 = vunpack.c.l.b16 %v913
    %v1622 = vunpack.c.h.b16 %v913
    %v1623 = vunpack.c.l.b16 %v914
    %v1624 = vunpack.c.h.b16 %v914
    %v1625 = vunpack.c.l.b16 %v915
    %v1626 = vunpack.c.h.b16 %v915
    %v1627 = vunpack.c.l.b16 %v916
    %v1628 = vunpack.c.h.b16 %v916
    %v1629 = vunpack.c.l.b16 %v917
    %v1630 = vunpack.c.h.b16 %v917
    %v1631 = vunpack.c.l.b16 %v918
    %v1632 = vunpack.c.h.b16 %v918
    %v1633 = vunpack.c.l.b16 %v919
    %v1634 = vunpack.c.h.b16 %v919
    %v1635 = vunpack.c.l.b16 %v920
    %v1636 = vunpack.c.h.b16 %v920
    %v1637 = vunpack.c.l.b16 %v921
    %v1638 = vunpack.c.h.b16 %v921
    %v1639 = vunpack.c.l.b16 %v922
    %v1640 = vunpack.c.h.b16 %v922
    %v1641 = vunpack.c.l.b16 %v923
    %v1642 = vunpack.c.h.b16 %v923
    %v1643 = vunpack.c.l.b16 %v924
    %v1644 = vunpack.c.h.b16 %v924
    %v1645 = vunpack.c.l.b16 %v925
    %v1646 = vunpack.c.h.b16 %v925
    %v1647 = vunpack.c.l.b16 %v926
    %v1648 = vunpack.c.h.b16 %v926
    %v1649 = vunpack.c.l.b16 %v927
    %v1650 = vunpack.c.h.b16 %v927
    %v1651 = vunpack.c.l.b16 %v928
    %v1652 = vunpack.c.h.b16 %v928
    %v1653 = vunpack.c.l.b16 %v929
    %v1654 = vunpack.c.h.b16 %v929
    %v1655 = vunpack.c.l.b16 %v930
    %v1656 = vunpack.c.h.b16 %v930
    %v1657 = vunpack.c.l.b16 %v931
    %v1658 = vunpack.c.h.b16 %v931
    %v1659 = vunpack.c.l.b16 %v932
    %v1660 = vunpack.c.h.b16 %v932
    %v1661 = vunpack.c.l.b16 %v933
    %v1662 = vunpack.c.h.b16 %v933
    %v1663 = vunpack.c.l.b16 %v934
    %v1664 = vunpack.c.h.b16 %v934
    %v1665 = vunpack.c.l.b16 %v935
    %v1666 = vunpack.c.h.b16 %v935
    %v1667 = vunpack.c.l.b16 %v936
    %v1668 = vunpack.c.h.b16 %v936
    %v1669 = vunpack.c.l.b16 %v937
    %v1670 = vunpack.c.h.b16 %v937
    %v1671 = vunpack.c.l.b16 %v938
    %v1672 = vunpack.c.h.b16 %v938
    %v1673 = vunpack.c.l.b16 %v939
    %v1674 = vunpack.c.h.b16 %v939
    %v1675 = vunpack.c.l.b16 %v940
    %v1676 = vunpack.c.h.b16 %v940
    %v1677 = vunpack.c.l.b16 %v941
    %v1678 = vunpack.c.h.b16 %v941
    %v1679 = vunpack.c.l.b16 %v942
    %v1680 = vunpack.c.h.b16 %v942
    %v1681 = vunpack.c.l.b16 %v943
    %v1682 = vunpack.c.h.b16 %v943
    %v1683 = vunpack.c.l.b16 %v944
    %v1684 = vunpack.c.h.b16 %v944
    %v1685 = vunpack.c.l.b16 %v945
    %v1686 = vunpack.c.h.b16 %v945
    %v1687 = vunpack.c.l.b16 %v946
    %v1688 = vunpack.c.h.b16 %v946
    %v1689 = vunpack.c.l.b16 %v947
    %v1690 = vunpack.c.h.b16 %v947
    %v1691 = vunpack.c.l.b16 %v948
    %v1692 = vunpack.c.h.b16 %v948
    %v1693 = vunpack.c.l.b16 %v949
    %v1694 = vunpack.c.h.b16 %v949
    %v1695 = vunpack.c.l.b16 %v950
    %v1696 = vunpack.c.h.b16 %v950
    %v1697 = vunpack.c.l.b16 %v951
    %v1698 = vunpack.c.h.b16 %v951
    %v1699 = vunpack.c.l.b16 %v952
    %v1700 = vunpack.c.h.b16 %v952
    %v1701 = vunpack.c.l.b16 %v953
    %v1702 = vunpack.c.h.b16 %v953
    %v1703 = vunpack.c.l.b16 %v954
    %v1704 = vunpack.c.h.b16 %v954
    %v1705 = vunpack.c.l.b16 %v955
    %v1706 = vunpack.c.h.b16 %v955
    %v1707 = vunpack.c.l.b16 %v956
    %v1708 = vunpack.c.h.b16 %v956
    %v1709 = vunpack.c.l.b16 %v957
    %v1710 = vunpack.c.h.b16 %v957
    %v1711 = vunpack.c.l.b16 %v958
    %v1712 = vunpack.c.h.b16 %v958
    %v1713 = vunpack.c.l.b16 %v959
    %v1714 = vunpack.c.h.b16 %v959
    %v1715 = vunpack.c.l.b16 %v960
    %v1716 = vunpack.c.h.b16 %v960
    %v1717 = vunpack.c.l.b16 %v961
    %v1718 = vunpack.c.h.b16 %v961
    %v1719 = vunpack.c.l.b16 %v962
    %v1720 = vunpack.c.h.b16 %v962
    %v1721 = vunpack.c.l.b16 %v963
    %v1722 = vunpack.c.h.b16 %v963
    %v1723 = vunpack.c.l.b16 %v964
    %v1724 = vunpack.c.h.b16 %v964
    %v1725 = vunpack.c.l.b16 %v965
    %v1726 = vunpack.c.h.b16 %v965
    %v1727 = vunpack.c.l.b16 %v966
    %v1728 = vunpack.c.h.b16 %v966
    %v1729 = vunpack.c.l.b16 %v967
    %v1730 = vunpack.c.h.b16 %v967
    %v1731 = vunpack.c.l.b16 %v968
    %v1732 = vunpack.c.h.b16 %v968
    %v1733 = vunpack.c.l.b16 %v969
    %v1734 = vunpack.c.h.b16 %v969
    %v1735 = vunpack.c.l.b16 %v970
    %v1736 = vunpack.c.h.b16 %v970
    %v1737 = vunpack.c.l.b16 %v971
    %v1738 = vunpack.c.h.b16 %v971
    %v1739 = vunpack.c.l.b16 %v972
    %v1740 = vunpack.c.h.b16 %v972
    %v1741 = vunpack.c.l.b16 %v973
    %v1742 = vunpack.c.h.b16 %v973
    %v1743 = vunpack.c.l.b16 %v974
    %v1744 = vunpack.c.h.b16 %v974
    %v1745 = vunpack.c.l.b16 %v975
    %v1746 = vunpack.c.h.b16 %v975
    %v1747 = vunpack.c.l.b16 %v976
    %v1748 = vunpack.c.h.b16 %v976
    %v1749 = vunpack.c.l.b16 %v977
    %v1750 = vunpack.c.h.b16 %v977
    %v1751 = vunpack.c.l.b16 %v978
    %v1752 = vunpack.c.h.b16 %v978
    %v1753 = vunpack.c.l.b16 %v979
    %v1754 = vunpack.c.h.b16 %v979
    %v1755 = vunpack.c.l.b16 %v980
    %v1756 = vunpack.c.h.b16 %v980
    %v1757 = vunpack.c.l.b16 %v981
    %v1758 = vunpack.c.h.b16 %v981
    %v1759 = vunpack.c.l.b16 %v982
    %v1760 = vunpack.c.h.b16 %v982
    %v1761 = vunpack.c.l.b16 %v983
    %v1762 = vunpack.c.h.b16 %v983
    %v1763 = vunpack.c.l.b16 %v984
    %v1764 = vunpack.c.h.b16 %v984
    %v1765 = vunpack.c.l.b16 %v985
    %v1766 = vunpack.c.h.b16 %v985
    %v1767 = vunpack.c.l.b16 %v986
    %v1768 = vunpack.c.h.b16 %v986
    %v1769 = vunpack.c.l.b16 %v987
    %v1770 = vunpack.c.h.b16 %v987
    %v1771 = vunpack.c.l.b16 %v988
    %v1772 = vunpack.c.h.b16 %v988
    %v1773 = vunpack.c.l.b16 %v989
    %v1774 = vunpack.c.h.b16 %v989
    %v1775 = vunpack.c.l.b16 %v990
    %v1776 = vunpack.c.h.b16 %v990
    %v1777 = vunpack.c.l.b16 %v991
    %v1778 = vunpack.c.h.b16 %v991
    %v1779 = vunpack.c.l.b16 %v992
    %v1780 = vunpack.c.h.b16 %v992
    %v1781 = vunpack.c.l.b16 %v993
    %v1782 = vunpack.c.h.b16 %v993
    %v1783 = vunpack.c.l.b16 %v994
    %v1784 = vunpack.c.h.b16 %v994
    %v1785 = vpack.c.b16 %v1277, %v1273
    %v1786 = vpack.c.b16 %v1278, %v1274
    %v1787 = vpack.c.b16 %v1279, %v1275
    %v1788 = vpack.c.b16 %v1280, %v1276
    %v1789 = vpack.c.b16 %v1285, %v1281
    %v1790 = vpack.c.b16 %v1286, %v1282
    %v1791 = vpack.c.b16 %v1287, %v1283
    %v1792 = vpack.c.b16 %v1288, %v1284
    %v1793 = vpack.c.b16 %v1293, %v1289
    %v1794 = vpack.c.b16 %v1294, %v1290
    %v1795 = vpack.c.b16 %v1295, %v1291
    %v1796 = vpack.c.b16 %v1296, %v1292
    %v1797 = vpack.c.b16 %v1301, %v1297
    %v1798 = vpack.c.b16 %v1302, %v1298
    %v1799 = vpack.c.b16 %v1303, %v1299
    %v1800 = vpack.c.b16 %v1304, %v1300
    %v1801 = vpack.c.b16 %v1309, %v1305
    %v1802 = vpack.c.b16 %v1310, %v1306
    %v1803 = vpack.c.b16 %v1311, %v1307
    %v1804 = vpack.c.b16 %v1312, %v1308
    %v1805 = vpack.c.b16 %v1317, %v1313
    %v1806 = vpack.c.b16 %v1318, %v1314
    %v1807 = vpack.c.b16 %v1319, %v1315
    %v1808 = vpack.c.b16 %v1320, %v1316
    %v1809 = vpack.c.b16 %v1325, %v1321
    %v1810 = vpack.c.b16 %v1326, %v1322
    %v1811 = vpack.c.b16 %v1327, %v1323
    %v1812 = vpack.c.b16 %v1328, %v1324
    %v1813 = vpack.c.b16 %v1333, %v1329
    %v1814 = vpack.c.b16 %v1334, %v1330
    %v1815 = vpack.c.b16 %v1335, %v1331
    %v1816 = vpack.c.b16 %v1336, %v1332
    %v1817 = vpack.c.b16 %v1341, %v1337
    %v1818 = vpack.c.b16 %v1342, %v1338
    %v1819 = vpack.c.b16 %v1343, %v1339
    %v1820 = vpack.c.b16 %v1344, %v1340
    %v1821 = vpack.c.b16 %v1349, %v1345
    %v1822 = vpack.c.b16 %v1350, %v1346
    %v1823 = vpack.c.b16 %v1351, %v1347
    %v1824 = vpack.c.b16 %v1352, %v1348
    %v1825 = vpack.c.b16 %v1357, %v1353
    %v1826 = vpack.c.b16 %v1358, %v1354
    %v1827 = vpack.c.b16 %v1359, %v1355
    %v1828 = vpack.c.b16 %v1360, %v1356
    %v1829 = vpack.c.b16 %v1365, %v1361
    %v1830 = vpack.c.b16 %v1366, %v1362
    %v1831 = vpack.c.b16 %v1367, %v1363
    %v1832 = vpack.c.b16 %v1368, %v1364
    %v1833 = vpack.c.b16 %v1373, %v1369
    %v1834 = vpack.c.b16 %v1374, %v1370
    %v1835 = vpack.c.b16 %v1375, %v1371
    %v1836 = vpack.c.b16 %v1376, %v1372
    %v1837 = vpack.c.b16 %v1381, %v1377
    %v1838 = vpack.c.b16 %v1382, %v1378
    %v1839 = vpack.c.b16 %v1383, %v1379
    %v1840 = vpack.c.b16 %v1384, %v1380
    %v1841 = vpack.c.b16 %v1389, %v1385
    %v1842 = vpack.c.b16 %v1390, %v1386
    %v1843 = vpack.c.b16 %v1391, %v1387
    %v1844 = vpack.c.b16 %v1392, %v1388
    %v1845 = vpack.c.b16 %v1397, %v1393
    %v1846 = vpack.c.b16 %v1398, %v1394
    %v1847 = vpack.c.b16 %v1399, %v1395
    %v1848 = vpack.c.b16 %v1400, %v1396
    %v1849 = vpack.c.b16 %v1405, %v1401
    %v1850 = vpack.c.b16 %v1406, %v1402
    %v1851 = vpack.c.b16 %v1407, %v1403
    %v1852 = vpack.c.b16 %v1408, %v1404
    %v1853 = vpack.c.b16 %v1413, %v1409
    %v1854 = vpack.c.b16 %v1414, %v1410
    %v1855 = vpack.c.b16 %v1415, %v1411
    %v1856 = vpack.c.b16 %v1416, %v1412
    %v1857 = vpack.c.b16 %v1421, %v1417
    %v1858 = vpack.c.b16 %v1422, %v1418
    %v1859 = vpack.c.b16 %v1423, %v1419
    %v1860 = vpack.c.b16 %v1424, %v1420
    %v1861 = vpack.c.b16 %v1429, %v1425
    %v1862 = vpack.c.b16 %v1430, %v1426
    %v1863 = vpack.c.b16 %v1431, %v1427
    %v1864 = vpack.c.b16 %v1432, %v1428
    %v1865 = vpack.c.b16 %v1437, %v1433
    %v1866 = vpack.c.b16 %v1438, %v1434
    %v1867 = vpack.c.b16 %v1439, %v1435
    %v1868 = vpack.c.b16 %v1440, %v1436
    %v1869 = vpack.c.b16 %v1445, %v1441
    %v1870 = vpack.c.b16 %v1446, %v1442
    %v1871 = vpack.c.b16 %v1447, %v1443
    %v1872 = vpack.c.b16 %v1448, %v1444
    %v1873 = vpack.c.b16 %v1453, %v1449
    %v1874 = vpack.c.b16 %v1454, %v1450
    %v1875 = vpack.c.b16 %v1455, %v1451
    %v1876 = vpack.c.b16 %v1456, %v1452
    %v1877 = vpack.c.b16 %v1461, %v1457
    %v1878 = vpack.c.b16 %v1462, %v1458
    %v1879 = vpack.c.b16 %v1463, %v1459
    %v1880 = vpack.c.b16 %v1464, %v1460
    %v1881 = vpack.c.b16 %v1469, %v1465
    %v1882 = vpack.c.b16 %v1470, %v1466
    %v1883 = vpack.c.b16 %v1471, %v1467
    %v1884 = vpack.c.b16 %v1472, %v1468
    %v1885 = vpack.c.b16 %v1477, %v1473
    %v1886 = vpack.c.b16 %v1478, %v1474
    %v1887 = vpack.c.b16 %v1479, %v1475
    %v1888 = vpack.c.b16 %v1480, %v1476
    %v1889 = vpack.c.b16 %v1485, %v1481
    %v1890 = vpack.c.b16 %v1486, %v1482
    %v1891 = vpack.c.b16 %v1487, %v1483
    %v1892 = vpack.c.b16 %v1488, %v1484
    %v1893 = vpack.c.b16 %v1493, %v1489
    %v1894 = vpack.c.b16 %v1494, %v1490
    %v1895 = vpack.c.b16 %v1495, %v1491
    %v1896 = vpack.c.b16 %v1496, %v1492
    %v1897 = vpack.c.b16 %v1501, %v1497
    %v1898 = vpack.c.b16 %v1502, %v1498
    %v1899 = vpack.c.b16 %v1503, %v1499
    %v1900 = vpack.c.b16 %v1504, %v1500
    %v1901 = vpack.c.b16 %v1509, %v1505
    %v1902 = vpack.c.b16 %v1510, %v1506
    %v1903 = vpack.c.b16 %v1511, %v1507
    %v1904 = vpack.c.b16 %v1512, %v1508
    %v1905 = vpack.c.b16 %v1517, %v1513
    %v1906 = vpack.c.b16 %v1518, %v1514
    %v1907 = vpack.c.b16 %v1519, %v1515
    %v1908 = vpack.c.b16 %v1520, %v1516
    %v1909 = vpack.c.b16 %v1525, %v1521
    %v1910 = vpack.c.b16 %v1526, %v1522
    %v1911 = vpack.c.b16 %v1527, %v1523
    %v1912 = vpack.c.b16 %v1528, %v1524
    %v1913 = vpack.c.b16 %v1533, %v1529
    %v1914 = vpack.c.b16 %v1534, %v1530
    %v1915 = vpack.c.b16 %v1535, %v1531
    %v1916 = vpack.c.b16 %v1536, %v1532
    %v1917 = vpack.c.b16 %v1541, %v1537
    %v1918 = vpack.c.b16 %v1542, %v1538
    %v1919 = vpack.c.b16 %v1543, %v1539
    %v1920 = vpack.c.b16 %v1544, %v1540
    %v1921 = vpack.c.b16 %v1549, %v1545
    %v1922 = vpack.c.b16 %v1550, %v1546
    %v1923 = vpack.c.b16 %v1551, %v1547
    %v1924 = vpack.c.b16 %v1552, %v1548
    %v1925 = vpack.c.b16 %v1557, %v1553
    %v1926 = vpack.c.b16 %v1558, %v1554
    %v1927 = vpack.c.b16 %v1559, %v1555
    %v1928 = vpack.c.b16 %v1560, %v1556
    %v1929 = vpack.c.b16 %v1565, %v1561
    %v1930 = vpack.c.b16 %v1566, %v1562
    %v1931 = vpack.c.b16 %v1567, %v1563
    %v1932 = vpack.c.b16 %v1568, %v1564
    %v1933 = vpack.c.b16 %v1573, %v1569
    %v1934 = vpack.c.b16 %v1574, %v1570
    %v1935 = vpack.c.b16 %v1575, %v1571
    %v1936 = vpack.c.b16 %v1576, %v1572
    %v1937 = vpack.c.b16 %v1581, %v1577
    %v1938 = vpack.c.b16 %v1582, %v1578
    %v1939 = vpack.c.b16 %v1583, %v1579
    %v1940 = vpack.c.b16 %v1584, %v1580
    %v1941 = vpack.c.b16 %v1589, %v1585
    %v1942 = vpack.c.b16 %v1590, %v1586
    %v1943 = vpack.c.b16 %v1591, %v1587
    %v1944 = vpack.c.b16 %v1592, %v1588
    %v1945 = vpack.c.b16 %v1597, %v1593
    %v1946 = vpack.c.b16 %v1598, %v1594
    %v1947 = vpack.c.b16 %v1599, %v1595
    %v1948 = vpack.c.b16 %v1600, %v1596
    %v1949 = vpack.c.b16 %v1605, %v1601
    %v1950 = vpack.c.b16 %v1606, %v1602
    %v1951 = vpack.c.b16 %v1607, %v1603
    %v1952 = vpack.c.b16 %v1608, %v1604
    %v1953 = vpack.c.b16 %v1613, %v1609
    %v1954 = vpack.c.b16 %v1614, %v1610
    %v1955 = vpack.c.b16 %v1615, %v1611
    %v1956 = vpack.c.b16 %v1616, %v1612
    %v1957 = vpack.c.b16 %v1621, %v1617
    %v1958 = vpack.c.b16 %v1622, %v1618
    %v1959 = vpack.c.b16 %v1623, %v1619
    %v1960 = vpack.c.b16 %v1624, %v1620
    %v1961 = vpack.c.b16 %v1629, %v1625
    %v1962 = vpack.c.b16 %v1630, %v1626
    %v1963 = vpack.c.b16 %v1631, %v1627
    %v1964 = vpack.c.b16 %v1632, %v1628
    %v1965 = vpack.c.b16 %v1637, %v1633
    %v1966 = vpack.c.b16 %v1638, %v1634
    %v1967 = vpack.c.b16 %v1639, %v1635
    %v1968 = vpack.c.b16 %v1640, %v1636
    %v1969 = vpack.c.b16 %v1645, %v1641
    %v1970 = vpack.c.b16 %v1646, %v1642
    %v1971 = vpack.c.b16 %v1647, %v1643
    %v1972 = vpack.c.b16 %v1648, %v1644
    %v1973 = vpack.c.b16 %v1653, %v1649
    %v1974 = vpack.c.b16 %v1654, %v1650
    %v1975 = vpack.c.b16 %v1655, %v1651
    %v1976 = vpack.c.b16 %v1656, %v1652
    %v1977 = vpack.c.b16 %v1661, %v1657
    %v1978 = vpack.c.b16 %v1662, %v1658
    %v1979 = vpack.c.b16 %v1663, %v1659
    %v1980 = vpack.c.b16 %v1664, %v1660
    %v1981 = vpack.c.b16 %v1669, %v1665
    %v1982 = vpack.c.b16 %v1670, %v1666
    %v1983 = vpack.c.b16 %v1671, %v1667
    %v1984 = vpack.c.b16 %v1672, %v1668
    %v1985 = vpack.c.b16 %v1677, %v1673
    %v1986 = vpack.c.b16 %v1678, %v1674
    %v1987 = vpack.c.b16 %v1679, %v1675
    %v1988 = vpack.c.b16 %v1680, %v1676
    %v1989 = vpack.c.b16 %v1685, %v1681
    %v1990 = vpack.c.b16 %v1686, %v1682
    %v1991 = vpack.c.b16 %v1687, %v1683
    %v1992 = vpack.c.b16 %v1688, %v1684
    %v1993 = vpack.c.b16 %v1693, %v1689
    %v1994 = vpack.c.b16 %v1694, %v1690
    %v1995 = vpack.c.b16 %v1695, %v1691
    %v1996 = vpack.c.b16 %v1696, %v1692
    %v1997 = vpack.c.b16 %v1701, %v1697
    %v1998 = vpack.c.b16 %v1702, %v1698
    %v1999 = vpack.c.b16 %v1703, %v1699
    %v2000 = vpack.c.b16 %v1704, %v1700
    %v2001 = vpack.c.b16 %v1709, %v1705
    %v2002 = vpack.c.b16 %v1710, %v1706
    %v2003 = vpack.c.b16 %v1711, %v1707
    %v2004 = vpack.c.b16 %v1712, %v1708
    %v2005 = vpack.c.b16 %v1717, %v1713
    %v2006 = vpack.c.b16 %v1718, %v1714
    %v2007 = vpack.c.b16 %v1719, %v1715
    %v2008 = vpack.c.b16 %v1720, %v1716
    %v2009 = vpack.c.b16 %v1725, %v1721
    %v2010 = vpack.c.b16 %v1726, %v1722
    %v2011 = vpack.c.b16 %v1727, %v1723
    %v2012 = vpack.c.b16 %v1728, %v1724
    %v2013 = vpack.c.b16 %v1733, %v1729
    %v2014 = vpack.c.b16 %v1734, %v1730
    %v2015 = vpack.c.b16 %v1735, %v1731
    %v2016 = vpack.c.b16 %v1736, %v1732
    %v2017 = vpack.c.b16 %v1741, %v1737
    %v2018 = vpack.c.b16 %v1742, %v1738
    %v2019 = vpack.c.b16 %v1743, %v1739
    %v2020 = vpack.c.b16 %v1744, %v1740
    %v2021 = vpack.c.b16 %v1749, %v1745
    %v2022 = vpack.c.b16 %v1750, %v1746
    %v2023 = vpack.c.b16 %v1751, %v1747
    %v2024 = vpack.c.b16 %v1752, %v1748
    %v2025 = vpack.c.b16 %v1757, %v1753
    %v2026 = vpack.c.b16 %v1758, %v1754
    %v2027 = vpack.c.b16 %v1759, %v1755
    %v2028 = vpack.c.b16 %v1760, %v1756
    %v2029 = vpack.c.b16 %v1765, %v1761
    %v2030 = vpack.c.b16 %v1766, %v1762
    %v2031 = vpack.c.b16 %v1767, %v1763
    %v2032 = vpack.c.b16 %v1768, %v1764
    %v2033 = vpack.c.b16 %v1773, %v1769
    %v2034 = vpack.c.b16 %v1774, %v1770
    %v2035 = vpack.c.b16 %v1775, %v1771
    %v2036 = vpack.c.b16 %v1776, %v1772
    %v2037 = vpack.c.b16 %v1781, %v1777
    %v2038 = vpack.c.b16 %v1782, %v1778
    %v2039 = vpack.c.b16 %v1783, %v1779
    %v2040 = vpack.c.b16 %v1784, %v1780
    %2297 = vmatprep.subr.bf16.mxu0 %v1786
    %2298 = vmatpush1.bf16.msra.mxu0 %v1785
    %2299 = vmatprep.subr.bf16.mxu0 %v1790
    %2300 = vmatpush1.bf16.msra.mxu0 %v1789
    %2301 = vmatprep.subr.bf16.mxu0 %v1794
    %2302 = vmatpush1.bf16.msra.mxu0 %v1793
    %2303 = vmatprep.subr.bf16.mxu0 %v1798
    %2304 = vmatpush1.bf16.msra.mxu0 %v1797
    %2305 = vmatprep.subr.bf16.mxu0 %v1802
    %2306 = vmatpush1.bf16.msra.mxu0 %v1801
    %2307 = vmatprep.subr.bf16.mxu0 %v1806
    %2308 = vmatpush1.bf16.msra.mxu0 %v1805
    %2309 = vmatprep.subr.bf16.mxu0 %v1810
    %2310 = vmatpush1.bf16.msra.mxu0 %v1809
    %2311 = vmatprep.subr.bf16.mxu0 %v1814
    %2312 = vmatpush1.bf16.msra.mxu0 %v1813
    %2313 = vmatprep.subr.bf16.mxu0 %v1818
    %2314 = vmatpush1.bf16.msra.mxu0 %v1817
    %2315 = vmatprep.subr.bf16.mxu0 %v1822
    %2316 = vmatpush1.bf16.msra.mxu0 %v1821
    %2317 = vmatprep.subr.bf16.mxu0 %v1826
    %2318 = vmatpush1.bf16.msra.mxu0 %v1825
    %2319 = vmatprep.subr.bf16.mxu0 %v1830
    %2320 = vmatpush1.bf16.msra.mxu0 %v1829
    %2321 = vmatprep.subr.bf16.mxu0 %v1834
    %2322 = vmatpush1.bf16.msra.mxu0 %v1833
    %2323 = vmatprep.subr.bf16.mxu0 %v1838
    %2324 = vmatpush1.bf16.msra.mxu0 %v1837
    %2325 = vmatprep.subr.bf16.mxu0 %v1842
    %2326 = vmatpush1.bf16.msra.mxu0 %v1841
    %2327 = vmatprep.subr.bf16.mxu0 %v1846
    %2328 = vmatpush1.bf16.msra.mxu0 %v1845
    %2329 = vmatprep.mubr.bf16.mxu0 %v732
    %2330 = vmatmul.mubr.bf16.gmra.mrb[0].mxu0 %v731
    %v2331 = vpop.f32.mrb[0].mxu0
    %v2332 = vadd.f32 %v1000, %v2331
    %v2333 = vpop.f32.mrb[0].mxu0
    %v2334 = vadd.f32 %v1004, %v2333
    %v2335 = vpop.f32.mrb[0].mxu0
    %v2336 = vadd.f32 %v1000, %v2335
    %v2337 = vpop.f32.mrb[0].mxu0
    %v2338 = vadd.f32 %v1004, %v2337
    %2339 = vdwg.mxu0
    %2340 = vmatprep.subr.bf16.mxu0 %v1850
    %2341 = vmatpush1.bf16.msra.mxu0 %v1849
    %2342 = vmatprep.subr.bf16.mxu0 %v1854
    %2343 = vmatpush1.bf16.msra.mxu0 %v1853
    %2344 = vmatprep.subr.bf16.mxu0 %v1858
    %2345 = vmatpush1.bf16.msra.mxu0 %v1857
    %2346 = vmatprep.subr.bf16.mxu0 %v1862
    %2347 = vmatpush1.bf16.msra.mxu0 %v1861
    %2348 = vmatprep.subr.bf16.mxu0 %v1866
    %2349 = vmatpush1.bf16.msra.mxu0 %v1865
    %2350 = vmatprep.subr.bf16.mxu0 %v1870
    %2351 = vmatpush1.bf16.msra.mxu0 %v1869
    %2352 = vmatprep.subr.bf16.mxu0 %v1874
    %2353 = vmatpush1.bf16.msra.mxu0 %v1873
    %2354 = vmatprep.subr.bf16.mxu0 %v1878
    %2355 = vmatpush1.bf16.msra.mxu0 %v1877
    %2356 = vmatprep.subr.bf16.mxu0 %v1882
    %2357 = vmatpush1.bf16.msra.mxu0 %v1881
    %2358 = vmatprep.subr.bf16.mxu0 %v1886
    %2359 = vmatpush1.bf16.msra.mxu0 %v1885
    %2360 = vmatprep.subr.bf16.mxu0 %v1890
    %2361 = vmatpush1.bf16.msra.mxu0 %v1889
    %2362 = vmatprep.subr.bf16.mxu0 %v1894
    %2363 = vmatpush1.bf16.msra.mxu0 %v1893
    %2364 = vmatprep.subr.bf16.mxu0 %v1898
    %2365 = vmatpush1.bf16.msra.mxu0 %v1897
    %2366 = vmatprep.subr.bf16.mxu0 %v1902
    %2367 = vmatpush1.bf16.msra.mxu0 %v1901
    %2368 = vmatprep.subr.bf16.mxu0 %v1906
    %2369 = vmatpush1.bf16.msra.mxu0 %v1905
    %2370 = vmatprep.subr.bf16.mxu0 %v1910
    %2371 = vmatpush1.bf16.msra.mxu0 %v1909
    %2372 = vmatprep.mubr.bf16.mxu0 %v734
    %2373 = vmatmul.mubr.bf16.gmra.mrb[0].mxu0 %v733
    %v2374 = vpop.f32.mrb[0].mxu0
    %v2375 = vadd.f32 %v2332, %v2374
    %v2376 = vpop.f32.mrb[0].mxu0
    %v2377 = vadd.f32 %v2334, %v2376
    %v2378 = vpop.f32.mrb[0].mxu0
    %v2379 = vadd.f32 %v2336, %v2378
    %v2380 = vpop.f32.mrb[0].mxu0
    %v2381 = vadd.f32 %v2338, %v2380
    %2382 = vdwg.mxu0
    %2383 = vmatprep.subr.bf16.mxu0 %v1914
    %2384 = vmatpush1.bf16.msra.mxu0 %v1913
    %2385 = vmatprep.subr.bf16.mxu0 %v1918
    %2386 = vmatpush1.bf16.msra.mxu0 %v1917
    %2387 = vmatprep.subr.bf16.mxu0 %v1922
    %2388 = vmatpush1.bf16.msra.mxu0 %v1921
    %2389 = vmatprep.subr.bf16.mxu0 %v1926
    %2390 = vmatpush1.bf16.msra.mxu0 %v1925
    %2391 = vmatprep.subr.bf16.mxu0 %v1930
    %2392 = vmatpush1.bf16.msra.mxu0 %v1929
    %2393 = vmatprep.subr.bf16.mxu0 %v1934
    %2394 = vmatpush1.bf16.msra.mxu0 %v1933
    %2395 = vmatprep.subr.bf16.mxu0 %v1938
    %2396 = vmatpush1.bf16.msra.mxu0 %v1937
    %2397 = vmatprep.subr.bf16.mxu0 %v1942
    %2398 = vmatpush1.bf16.msra.mxu0 %v1941
    %2399 = vmatprep.subr.bf16.mxu0 %v1946
    %2400 = vmatpush1.bf16.msra.mxu0 %v1945
    %2401 = vmatprep.subr.bf16.mxu0 %v1950
    %2402 = vmatpush1.bf16.msra.mxu0 %v1949
    %2403 = vmatprep.subr.bf16.mxu0 %v1954
    %2404 = vmatpush1.bf16.msra.mxu0 %v1953
    %2405 = vmatprep.subr.bf16.mxu0 %v1958
    %2406 = vmatpush1.bf16.msra.mxu0 %v1957
    %2407 = vmatprep.subr.bf16.mxu0 %v1962
    %2408 = vmatpush1.bf16.msra.mxu0 %v1961
    %2409 = vmatprep.subr.bf16.mxu0 %v1966
    %2410 = vmatpush1.bf16.msra.mxu0 %v1965
    %2411 = vmatprep.subr.bf16.mxu0 %v1970
    %2412 = vmatpush1.bf16.msra.mxu0 %v1969
    %2413 = vmatprep.subr.bf16.mxu0 %v1974
    %2414 = vmatpush1.bf16.msra.mxu0 %v1973
    %2415 = vmatprep.mubr.bf16.mxu0 %v736
    %2416 = vmatmul.mubr.bf16.gmra.mrb[0].mxu0 %v735
    %v2417 = vpop.f32.mrb[0].mxu0
    %v2418 = vadd.f32 %v2375, %v2417
    %v2419 = vpop.f32.mrb[0].mxu0
    %v2420 = vadd.f32 %v2377, %v2419
    %v2421 = vpop.f32.mrb[0].mxu0
    %v2422 = vadd.f32 %v2379, %v2421
    %v2423 = vpop.f32.mrb[0].mxu0
    %v2424 = vadd.f32 %v2381, %v2423
    %2425 = vdwg.mxu0
    %2426 = vmatprep.subr.bf16.mxu0 %v1978
    %2427 = vmatpush1.bf16.msra.mxu0 %v1977
    %2428 = vmatprep.subr.bf16.mxu0 %v1982
    %2429 = vmatpush1.bf16.msra.mxu0 %v1981
    %2430 = vmatprep.subr.bf16.mxu0 %v1986
    %2431 = vmatpush1.bf16.msra.mxu0 %v1985
    %2432 = vmatprep.subr.bf16.mxu0 %v1990
    %2433 = vmatpush1.bf16.msra.mxu0 %v1989
    %2434 = vmatprep.subr.bf16.mxu0 %v1994
    %2435 = vmatpush1.bf16.msra.mxu0 %v1993
    %2436 = vmatprep.subr.bf16.mxu0 %v1998
    %2437 = vmatpush1.bf16.msra.mxu0 %v1997
    %2438 = vmatprep.subr.bf16.mxu0 %v2002
    %2439 = vmatpush1.bf16.msra.mxu0 %v2001
    %2440 = vmatprep.subr.bf16.mxu0 %v2006
    %2441 = vmatpush1.bf16.msra.mxu0 %v2005
    %2442 = vmatprep.subr.bf16.mxu0 %v2010
    %2443 = vmatpush1.bf16.msra.mxu0 %v2009
    %2444 = vmatprep.subr.bf16.mxu0 %v2014
    %2445 = vmatpush1.bf16.msra.mxu0 %v2013
    %2446 = vmatprep.subr.bf16.mxu0 %v2018
    %2447 = vmatpush1.bf16.msra.mxu0 %v2017
    %2448 = vmatprep.subr.bf16.mxu0 %v2022
    %2449 = vmatpush1.bf16.msra.mxu0 %v2021
    %2450 = vmatprep.subr.bf16.mxu0 %v2026
    %2451 = vmatpush1.bf16.msra.mxu0 %v2025
    %2452 = vmatprep.subr.bf16.mxu0 %v2030
    %2453 = vmatpush1.bf16.msra.mxu0 %v2029
    %2454 = vmatprep.subr.bf16.mxu0 %v2034
    %2455 = vmatpush1.bf16.msra.mxu0 %v2033
    %2456 = vmatprep.subr.bf16.mxu0 %v2038
    %2457 = vmatpush1.bf16.msra.mxu0 %v2037
    %2458 = vmatprep.mubr.bf16.mxu0 %v738
    %2459 = vmatmul.mubr.bf16.gmra.mrb[0].mxu0 %v737
    %v2460 = vpop.f32.mrb[0].mxu0
    %v2461 = vadd.f32 %v2418, %v2460
    %v2462 = vpop.f32.mrb[0].mxu0
    %v2463 = vadd.f32 %v2420, %v2462
    %v2464 = vpop.f32.mrb[0].mxu0
    %v2465 = vadd.f32 %v2422, %v2464
    %v2466 = vpop.f32.mrb[0].mxu0
    %v2467 = vadd.f32 %v2424, %v2466
    %2468 = vdwg.mxu0
    %2469 = vmatprep.subr.bf16.mxu0 %v1788
    %2470 = vmatpush1.bf16.msra.mxu0 %v1787
    %2471 = vmatprep.subr.bf16.mxu0 %v1792
    %2472 = vmatpush1.bf16.msra.mxu0 %v1791
    %2473 = vmatprep.subr.bf16.mxu0 %v1796
    %2474 = vmatpush1.bf16.msra.mxu0 %v1795
    %2475 = vmatprep.subr.bf16.mxu0 %v1800
    %2476 = vmatpush1.bf16.msra.mxu0 %v1799
    %2477 = vmatprep.subr.bf16.mxu0 %v1804
    %2478 = vmatpush1.bf16.msra.mxu0 %v1803
    %2479 = vmatprep.subr.bf16.mxu0 %v1808
    %2480 = vmatpush1.bf16.msra.mxu0 %v1807
    %2481 = vmatprep.subr.bf16.mxu0 %v1812
    %2482 = vmatpush1.bf16.msra.mxu0 %v1811
    %2483 = vmatprep.subr.bf16.mxu0 %v1816
    %2484 = vmatpush1.bf16.msra.mxu0 %v1815
    %2485 = vmatprep.subr.bf16.mxu0 %v1820
    %2486 = vmatpush1.bf16.msra.mxu0 %v1819
    %2487 = vmatprep.subr.bf16.mxu0 %v1824
    %2488 = vmatpush1.bf16.msra.mxu0 %v1823
    %2489 = vmatprep.subr.bf16.mxu0 %v1828
    %2490 = vmatpush1.bf16.msra.mxu0 %v1827
    %2491 = vmatprep.subr.bf16.mxu0 %v1832
    %2492 = vmatpush1.bf16.msra.mxu0 %v1831
    %2493 = vmatprep.subr.bf16.mxu0 %v1836
    %2494 = vmatpush1.bf16.msra.mxu0 %v1835
    %2495 = vmatprep.subr.bf16.mxu0 %v1840
    %2496 = vmatpush1.bf16.msra.mxu0 %v1839
    %2497 = vmatprep.subr.bf16.mxu0 %v1844
    %2498 = vmatpush1.bf16.msra.mxu0 %v1843
    %2499 = vmatprep.subr.bf16.mxu0 %v1848
    %2500 = vmatpush1.bf16.msra.mxu0 %v1847
    %2501 = vmatprep.mubr.bf16.mxu0 %v732
    %2502 = vmatmul.mubr.bf16.gmra.mrb[0].mxu0 %v731
    %v2503 = vpop.f32.mrb[0].mxu0
    %v2504 = vadd.f32 %v1008, %v2503
    %v2505 = vpop.f32.mrb[0].mxu0
    %v2506 = vadd.f32 %v1012, %v2505
    %v2507 = vpop.f32.mrb[0].mxu0
    %v2508 = vadd.f32 %v1008, %v2507
    %v2509 = vpop.f32.mrb[0].mxu0
    %v2510 = vadd.f32 %v1012, %v2509
    %2511 = vdwg.mxu0
    %2512 = vmatprep.subr.bf16.mxu0 %v1852
    %2513 = vmatpush1.bf16.msra.mxu0 %v1851
    %2514 = vmatprep.subr.bf16.mxu0 %v1856
    %2515 = vmatpush1.bf16.msra.mxu0 %v1855
    %2516 = vmatprep.subr.bf16.mxu0 %v1860
    %2517 = vmatpush1.bf16.msra.mxu0 %v1859
    %2518 = vmatprep.subr.bf16.mxu0 %v1864
    %2519 = vmatpush1.bf16.msra.mxu0 %v1863
    %2520 = vmatprep.subr.bf16.mxu0 %v1868
    %2521 = vmatpush1.bf16.msra.mxu0 %v1867
    %2522 = vmatprep.subr.bf16.mxu0 %v1872
    %2523 = vmatpush1.bf16.msra.mxu0 %v1871
    %2524 = vmatprep.subr.bf16.mxu0 %v1876
    %2525 = vmatpush1.bf16.msra.mxu0 %v1875
    %2526 = vmatprep.subr.bf16.mxu0 %v1880
    %2527 = vmatpush1.bf16.msra.mxu0 %v1879
    %2528 = vmatprep.subr.bf16.mxu0 %v1884
    %2529 = vmatpush1.bf16.msra.mxu0 %v1883
    %2530 = vmatprep.subr.bf16.mxu0 %v1888
    %2531 = vmatpush1.bf16.msra.mxu0 %v1887
    %2532 = vmatprep.subr.bf16.mxu0 %v1892
    %2533 = vmatpush1.bf16.msra.mxu0 %v1891
    %2534 = vmatprep.subr.bf16.mxu0 %v1896
    %2535 = vmatpush1.bf16.msra.mxu0 %v1895
    %2536 = vmatprep.subr.bf16.mxu0 %v1900
    %2537 = vmatpush1.bf16.msra.mxu0 %v1899
    %2538 = vmatprep.subr.bf16.mxu0 %v1904
    %2539 = vmatpush1.bf16.msra.mxu0 %v1903
    %2540 = vmatprep.subr.bf16.mxu0 %v1908
    %2541 = vmatpush1.bf16.msra.mxu0 %v1907
    %2542 = vmatprep.subr.bf16.mxu0 %v1912
    %2543 = vmatpush1.bf16.msra.mxu0 %v1911
    %2544 = vmatprep.mubr.bf16.mxu0 %v734
    %2545 = vmatmul.mubr.bf16.gmra.mrb[0].mxu0 %v733
    %v2546 = vpop.f32.mrb[0].mxu0
    %v2547 = vadd.f32 %v2504, %v2546
    %v2548 = vpop.f32.mrb[0].mxu0
    %v2549 = vadd.f32 %v2506, %v2548
    %v2550 = vpop.f32.mrb[0].mxu0
    %v2551 = vadd.f32 %v2508, %v2550
    %v2552 = vpop.f32.mrb[0].mxu0
    %v2553 = vadd.f32 %v2510, %v2552
    %2554 = vdwg.mxu0
    %2555 = vmatprep.subr.bf16.mxu0 %v1916
    %2556 = vmatpush1.bf16.msra.mxu0 %v1915
    %2557 = vmatprep.subr.bf16.mxu0 %v1920
    %2558 = vmatpush1.bf16.msra.mxu0 %v1919
    %2559 = vmatprep.subr.bf16.mxu0 %v1924
    %2560 = vmatpush1.bf16.msra.mxu0 %v1923
    %2561 = vmatprep.subr.bf16.mxu0 %v1928
    %2562 = vmatpush1.bf16.msra.mxu0 %v1927
    %2563 = vmatprep.subr.bf16.mxu0 %v1932
    %2564 = vmatpush1.bf16.msra.mxu0 %v1931
    %2565 = vmatprep.subr.bf16.mxu0 %v1936
    %2566 = vmatpush1.bf16.msra.mxu0 %v1935
    %2567 = vmatprep.subr.bf16.mxu0 %v1940
    %2568 = vmatpush1.bf16.msra.mxu0 %v1939
    %2569 = vmatprep.subr.bf16.mxu0 %v1944
    %2570 = vmatpush1.bf16.msra.mxu0 %v1943
    %2571 = vmatprep.subr.bf16.mxu0 %v1948
    %2572 = vmatpush1.bf16.msra.mxu0 %v1947
    %2573 = vmatprep.subr.bf16.mxu0 %v1952
    %2574 = vmatpush1.bf16.msra.mxu0 %v1951
    %2575 = vmatprep.subr.bf16.mxu0 %v1956
    %2576 = vmatpush1.bf16.msra.mxu0 %v1955
    %2577 = vmatprep.subr.bf16.mxu0 %v1960
    %2578 = vmatpush1.bf16.msra.mxu0 %v1959
    %2579 = vmatprep.subr.bf16.mxu0 %v1964
    %2580 = vmatpush1.bf16.msra.mxu0 %v1963
    %2581 = vmatprep.subr.bf16.mxu0 %v1968
    %2582 = vmatpush1.bf16.msra.mxu0 %v1967
    %2583 = vmatprep.subr.bf16.mxu0 %v1972
    %2584 = vmatpush1.bf16.msra.mxu0 %v1971
    %2585 = vmatprep.subr.bf16.mxu0 %v1976
    %2586 = vmatpush1.bf16.msra.mxu0 %v1975
    %2587 = vmatprep.mubr.bf16.mxu0 %v736
    %2588 = vmatmul.mubr.bf16.gmra.mrb[0].mxu0 %v735
    %v2589 = vpop.f32.mrb[0].mxu0
    %v2590 = vadd.f32 %v2547, %v2589
    %v2591 = vpop.f32.mrb[0].mxu0
    %v2592 = vadd.f32 %v2549, %v2591
    %v2593 = vpop.f32.mrb[0].mxu0
    %v2594 = vadd.f32 %v2551, %v2593
    %v2595 = vpop.f32.mrb[0].mxu0
    %v2596 = vadd.f32 %v2553, %v2595
    %2597 = vdwg.mxu0
    %2598 = vmatprep.subr.bf16.mxu0 %v1980
    %2599 = vmatpush1.bf16.msra.mxu0 %v1979
    %2600 = vmatprep.subr.bf16.mxu0 %v1984
    %2601 = vmatpush1.bf16.msra.mxu0 %v1983
    %2602 = vmatprep.subr.bf16.mxu0 %v1988
    %2603 = vmatpush1.bf16.msra.mxu0 %v1987
    %2604 = vmatprep.subr.bf16.mxu0 %v1992
    %2605 = vmatpush1.bf16.msra.mxu0 %v1991
    %2606 = vmatprep.subr.bf16.mxu0 %v1996
    %2607 = vmatpush1.bf16.msra.mxu0 %v1995
    %2608 = vmatprep.subr.bf16.mxu0 %v2000
    %2609 = vmatpush1.bf16.msra.mxu0 %v1999
    %2610 = vmatprep.subr.bf16.mxu0 %v2004
    %2611 = vmatpush1.bf16.msra.mxu0 %v2003
    %2612 = vmatprep.subr.bf16.mxu0 %v2008
    %2613 = vmatpush1.bf16.msra.mxu0 %v2007
    %2614 = vmatprep.subr.bf16.mxu0 %v2012
    %2615 = vmatpush1.bf16.msra.mxu0 %v2011
    %2616 = vmatprep.subr.bf16.mxu0 %v2016
    %2617 = vmatpush1.bf16.msra.mxu0 %v2015
    %2618 = vmatprep.subr.bf16.mxu0 %v2020
    %2619 = vmatpush1.bf16.msra.mxu0 %v2019
    %2620 = vmatprep.subr.bf16.mxu0 %v2024
    %2621 = vmatpush1.bf16.msra.mxu0 %v2023
    %2622 = vmatprep.subr.bf16.mxu0 %v2028
    %2623 = vmatpush1.bf16.msra.mxu0 %v2027
    %2624 = vmatprep.subr.bf16.mxu0 %v2032
    %2625 = vmatpush1.bf16.msra.mxu0 %v2031
    %2626 = vmatprep.subr.bf16.mxu0 %v2036
    %2627 = vmatpush1.bf16.msra.mxu0 %v2035
    %2628 = vmatprep.subr.bf16.mxu0 %v2040
    %2629 = vmatpush1.bf16.msra.mxu0 %v2039
    %2630 = vmatprep.mubr.bf16.mxu0 %v738
    %2631 = vmatmul.mubr.bf16.gmra.mrb[0].mxu0 %v737
    %v2632 = vpop.f32.mrb[0].mxu0
    %v2633 = vadd.f32 %v2590, %v2632
    %v2634 = vpop.f32.mrb[0].mxu0
    %v2635 = vadd.f32 %v2592, %v2634
    %v2636 = vpop.f32.mrb[0].mxu0
    %v2637 = vadd.f32 %v2594, %v2636
    %v2638 = vpop.f32.mrb[0].mxu0
    %v2639 = vadd.f32 %v2596, %v2638
    %2640 = vdwg.mxu0
    %v2641 = vmax.f32 %v2461, 0.0
    %v2642 = vmax.f32 %v2463, 0.0
    %v2643 = vmax.f32 %v2633, 0.0
    %v2644 = vmax.f32 %v2635, 0.0
    %v2645 = vmax.f32 %v2465, 0.0
    %v2646 = vmax.f32 %v2467, 0.0
    %v2647 = vmax.f32 %v2637, 0.0
    %v2648 = vmax.f32 %v2639, 0.0
    %v2649 = vpack.c.bf16 %v2645, %v2641
    %v2650 = vpack.c.bf16 %v2646, %v2642
    %v2651 = vpack.c.bf16 %v2647, %v2643
    %v2652 = vpack.c.bf16 %v2648, %v2644
    %v2653 = vld [vmem:[#allocation10] sm:$0xff]
    %v2654 = vld [vmem:[#allocation10 + $0x8] sm:$0xff]
    %v2655 = vld [vmem:[#allocation10 + $0x10] sm:$0xff]
    %v2656 = vld [vmem:[#allocation10 + $0x18] sm:$0xff]
    %v2657 = vld [vmem:[#allocation10 + $0x20] sm:$0xff]
    %v2658 = vld [vmem:[#allocation10 + $0x28] sm:$0xff]
    %v2659 = vld [vmem:[#allocation10 + $0x30] sm:$0xff]
    %v2660 = vld [vmem:[#allocation10 + $0x38] sm:$0xff]
    %v2661 = vld [vmem:[#allocation10 + $0x40] sm:$0xff]
    %v2662 = vld [vmem:[#allocation10 + $0x48] sm:$0xff]
    %v2663 = vld [vmem:[#allocation10 + $0x50] sm:$0xff]
    %v2664 = vld [vmem:[#allocation10 + $0x58] sm:$0xff]
    %v2665 = vld [vmem:[#allocation10 + $0x60] sm:$0xff]
    %v2666 = vld [vmem:[#allocation10 + $0x68] sm:$0xff]
    %v2667 = vld [vmem:[#allocation10 + $0x70] sm:$0xff]
    %v2668 = vld [vmem:[#allocation10 + $0x78] sm:$0xff]
    %v2669 = vld [vmem:[#allocation10 + $0x80] sm:$0xff]
    %v2670 = vld [vmem:[#allocation10 + $0x88] sm:$0xff]
    %v2671 = vld [vmem:[#allocation10 + $0x90] sm:$0xff]
    %v2672 = vld [vmem:[#allocation10 + $0x98] sm:$0xff]
    %v2673 = vld [vmem:[#allocation10 + $0xa0] sm:$0xff]
    %v2674 = vld [vmem:[#allocation10 + $0xa8] sm:$0xff]
    %v2675 = vld [vmem:[#allocation10 + $0xb0] sm:$0xff]
    %v2676 = vld [vmem:[#allocation10 + $0xb8] sm:$0xff]
    %v2677 = vld [vmem:[#allocation10 + $0xc0] sm:$0xff]
    %v2678 = vld [vmem:[#allocation10 + $0xc8] sm:$0xff]
    %v2679 = vld [vmem:[#allocation10 + $0xd0] sm:$0xff]
    %v2680 = vld [vmem:[#allocation10 + $0xd8] sm:$0xff]
    %v2681 = vld [vmem:[#allocation10 + $0xe0] sm:$0xff]
    %v2682 = vld [vmem:[#allocation10 + $0xe8] sm:$0xff]
    %v2683 = vld [vmem:[#allocation10 + $0xf0] sm:$0xff]
    %v2684 = vld [vmem:[#allocation10 + $0xf8] sm:$0xff]
    %v2685 = vld [vmem:[#allocation10 + $0x100] sm:$0xff]
    %v2686 = vld [vmem:[#allocation10 + $0x108] sm:$0xff]
    %v2687 = vld [vmem:[#allocation10 + $0x110] sm:$0xff]
    %v2688 = vld [vmem:[#allocation10 + $0x118] sm:$0xff]
    %v2689 = vld [vmem:[#allocation10 + $0x120] sm:$0xff]
    %v2690 = vld [vmem:[#allocation10 + $0x128] sm:$0xff]
    %v2691 = vld [vmem:[#allocation10 + $0x130] sm:$0xff]
    %v2692 = vld [vmem:[#allocation10 + $0x138] sm:$0xff]
    %v2693 = vld [vmem:[#allocation10 + $0x140] sm:$0xff]
    %v2694 = vld [vmem:[#allocation10 + $0x148] sm:$0xff]
    %v2695 = vld [vmem:[#allocation10 + $0x150] sm:$0xff]
    %v2696 = vld [vmem:[#allocation10 + $0x158] sm:$0xff]
    %v2697 = vld [vmem:[#allocation10 + $0x160] sm:$0xff]
    %v2698 = vld [vmem:[#allocation10 + $0x168] sm:$0xff]
    %v2699 = vld [vmem:[#allocation10 + $0x170] sm:$0xff]
    %v2700 = vld [vmem:[#allocation10 + $0x178] sm:$0xff]
    %v2701 = vld [vmem:[#allocation10 + $0x180] sm:$0xff]
    %v2702 = vld [vmem:[#allocation10 + $0x188] sm:$0xff]
    %v2703 = vld [vmem:[#allocation10 + $0x190] sm:$0xff]
    %v2704 = vld [vmem:[#allocation10 + $0x198] sm:$0xff]
    %v2705 = vld [vmem:[#allocation10 + $0x1a0] sm:$0xff]
    %v2706 = vld [vmem:[#allocation10 + $0x1a8] sm:$0xff]
    %v2707 = vld [vmem:[#allocation10 + $0x1b0] sm:$0xff]
    %v2708 = vld [vmem:[#allocation10 + $0x1b8] sm:$0xff]
    %v2709 = vld [vmem:[#allocation10 + $0x1c0] sm:$0xff]
    %v2710 = vld [vmem:[#allocation10 + $0x1c8] sm:$0xff]
    %v2711 = vld [vmem:[#allocation10 + $0x1d0] sm:$0xff]
    %v2712 = vld [vmem:[#allocation10 + $0x1d8] sm:$0xff]
    %v2713 = vld [vmem:[#allocation10 + $0x1e0] sm:$0xff]
    %v2714 = vld [vmem:[#allocation10 + $0x1e8] sm:$0xff]
    %v2715 = vld [vmem:[#allocation10 + $0x1f0] sm:$0xff]
    %v2716 = vld [vmem:[#allocation10 + $0x1f8] sm:$0xff]
    %v2717 = vld [vmem:[%s6] sm:$0x3]
    %v2719 = vlaneseq
    %v2720 = vshrl.u32 %v2719, 7
    %v2721 = vsub.s32 0, %v2720
    %v2722 = vrot.slane %v2717, %v2721
    %v2723 = vlaneseq
    %v2724 = vshrl.u32 %v2723, 7
    %v2725 = vsub.s32 1, %v2724
    %v2726 = vrot.slane %v2717, %v2725
    %v2793 = vunpack.c.l.b16 %v2653
    %v2794 = vunpack.c.h.b16 %v2653
    %v2795 = vunpack.c.l.b16 %v2654
    %v2796 = vunpack.c.h.b16 %v2654
    %v2797 = vunpack.c.l.b16 %v2655
    %v2798 = vunpack.c.h.b16 %v2655
    %v2799 = vunpack.c.l.b16 %v2656
    %v2800 = vunpack.c.h.b16 %v2656
    %v2801 = vunpack.c.l.b16 %v2657
    %v2802 = vunpack.c.h.b16 %v2657
    %v2803 = vunpack.c.l.b16 %v2658
    %v2804 = vunpack.c.h.b16 %v2658
    %v2805 = vunpack.c.l.b16 %v2659
    %v2806 = vunpack.c.h.b16 %v2659
    %v2807 = vunpack.c.l.b16 %v2660
    %v2808 = vunpack.c.h.b16 %v2660
    %v2809 = vunpack.c.l.b16 %v2661
    %v2810 = vunpack.c.h.b16 %v2661
    %v2811 = vunpack.c.l.b16 %v2662
    %v2812 = vunpack.c.h.b16 %v2662
    %v2813 = vunpack.c.l.b16 %v2663
    %v2814 = vunpack.c.h.b16 %v2663
    %v2815 = vunpack.c.l.b16 %v2664
    %v2816 = vunpack.c.h.b16 %v2664
    %v2817 = vunpack.c.l.b16 %v2665
    %v2818 = vunpack.c.h.b16 %v2665
    %v2819 = vunpack.c.l.b16 %v2666
    %v2820 = vunpack.c.h.b16 %v2666
    %v2821 = vunpack.c.l.b16 %v2667
    %v2822 = vunpack.c.h.b16 %v2667
    %v2823 = vunpack.c.l.b16 %v2668
    %v2824 = vunpack.c.h.b16 %v2668
    %v2825 = vunpack.c.l.b16 %v2669
    %v2826 = vunpack.c.h.b16 %v2669
    %v2827 = vunpack.c.l.b16 %v2670
    %v2828 = vunpack.c.h.b16 %v2670
    %v2829 = vunpack.c.l.b16 %v2671
    %v2830 = vunpack.c.h.b16 %v2671
    %v2831 = vunpack.c.l.b16 %v2672
    %v2832 = vunpack.c.h.b16 %v2672
    %v2833 = vunpack.c.l.b16 %v2673
    %v2834 = vunpack.c.h.b16 %v2673
    %v2835 = vunpack.c.l.b16 %v2674
    %v2836 = vunpack.c.h.b16 %v2674
    %v2837 = vunpack.c.l.b16 %v2675
    %v2838 = vunpack.c.h.b16 %v2675
    %v2839 = vunpack.c.l.b16 %v2676
    %v2840 = vunpack.c.h.b16 %v2676
    %v2841 = vunpack.c.l.b16 %v2677
    %v2842 = vunpack.c.h.b16 %v2677
    %v2843 = vunpack.c.l.b16 %v2678
    %v2844 = vunpack.c.h.b16 %v2678
    %v2845 = vunpack.c.l.b16 %v2679
    %v2846 = vunpack.c.h.b16 %v2679
    %v2847 = vunpack.c.l.b16 %v2680
    %v2848 = vunpack.c.h.b16 %v2680
    %v2849 = vunpack.c.l.b16 %v2681
    %v2850 = vunpack.c.h.b16 %v2681
    %v2851 = vunpack.c.l.b16 %v2682
    %v2852 = vunpack.c.h.b16 %v2682
    %v2853 = vunpack.c.l.b16 %v2683
    %v2854 = vunpack.c.h.b16 %v2683
    %v2855 = vunpack.c.l.b16 %v2684
    %v2856 = vunpack.c.h.b16 %v2684
    %v2857 = vunpack.c.l.b16 %v2685
    %v2858 = vunpack.c.h.b16 %v2685
    %v2859 = vunpack.c.l.b16 %v2686
    %v2860 = vunpack.c.h.b16 %v2686
    %v2861 = vunpack.c.l.b16 %v2687
    %v2862 = vunpack.c.h.b16 %v2687
    %v2863 = vunpack.c.l.b16 %v2688
    %v2864 = vunpack.c.h.b16 %v2688
    %v2865 = vunpack.c.l.b16 %v2689
    %v2866 = vunpack.c.h.b16 %v2689
    %v2867 = vunpack.c.l.b16 %v2690
    %v2868 = vunpack.c.h.b16 %v2690
    %v2869 = vunpack.c.l.b16 %v2691
    %v2870 = vunpack.c.h.b16 %v2691
    %v2871 = vunpack.c.l.b16 %v2692
    %v2872 = vunpack.c.h.b16 %v2692
    %v2873 = vunpack.c.l.b16 %v2693
    %v2874 = vunpack.c.h.b16 %v2693
    %v2875 = vunpack.c.l.b16 %v2694
    %v2876 = vunpack.c.h.b16 %v2694
    %v2877 = vunpack.c.l.b16 %v2695
    %v2878 = vunpack.c.h.b16 %v2695
    %v2879 = vunpack.c.l.b16 %v2696
    %v2880 = vunpack.c.h.b16 %v2696
    %v2881 = vunpack.c.l.b16 %v2697
    %v2882 = vunpack.c.h.b16 %v2697
    %v2883 = vunpack.c.l.b16 %v2698
    %v2884 = vunpack.c.h.b16 %v2698
    %v2885 = vunpack.c.l.b16 %v2699
    %v2886 = vunpack.c.h.b16 %v2699
    %v2887 = vunpack.c.l.b16 %v2700
    %v2888 = vunpack.c.h.b16 %v2700
    %v2889 = vunpack.c.l.b16 %v2701
    %v2890 = vunpack.c.h.b16 %v2701
    %v2891 = vunpack.c.l.b16 %v2702
    %v2892 = vunpack.c.h.b16 %v2702
    %v2893 = vunpack.c.l.b16 %v2703
    %v2894 = vunpack.c.h.b16 %v2703
    %v2895 = vunpack.c.l.b16 %v2704
    %v2896 = vunpack.c.h.b16 %v2704
    %v2897 = vunpack.c.l.b16 %v2705
    %v2898 = vunpack.c.h.b16 %v2705
    %v2899 = vunpack.c.l.b16 %v2706
    %v2900 = vunpack.c.h.b16 %v2706
    %v2901 = vunpack.c.l.b16 %v2707
    %v2902 = vunpack.c.h.b16 %v2707
    %v2903 = vunpack.c.l.b16 %v2708
    %v2904 = vunpack.c.h.b16 %v2708
    %v2905 = vunpack.c.l.b16 %v2709
    %v2906 = vunpack.c.h.b16 %v2709
    %v2907 = vunpack.c.l.b16 %v2710
    %v2908 = vunpack.c.h.b16 %v2710
    %v2909 = vunpack.c.l.b16 %v2711
    %v2910 = vunpack.c.h.b16 %v2711
    %v2911 = vunpack.c.l.b16 %v2712
    %v2912 = vunpack.c.h.b16 %v2712
    %v2913 = vunpack.c.l.b16 %v2713
    %v2914 = vunpack.c.h.b16 %v2713
    %v2915 = vunpack.c.l.b16 %v2714
    %v2916 = vunpack.c.h.b16 %v2714
    %v2917 = vunpack.c.l.b16 %v2715
    %v2918 = vunpack.c.h.b16 %v2715
    %v2919 = vunpack.c.l.b16 %v2716
    %v2920 = vunpack.c.h.b16 %v2716
    %v2921 = vpack.c.b16 %v2795, %v2793
    %v2922 = vpack.c.b16 %v2796, %v2794
    %v2923 = vpack.c.b16 %v2799, %v2797
    %v2924 = vpack.c.b16 %v2800, %v2798
    %v2925 = vpack.c.b16 %v2803, %v2801
    %v2926 = vpack.c.b16 %v2804, %v2802
    %v2927 = vpack.c.b16 %v2807, %v2805
    %v2928 = vpack.c.b16 %v2808, %v2806
    %v2929 = vpack.c.b16 %v2811, %v2809
    %v2930 = vpack.c.b16 %v2812, %v2810
    %v2931 = vpack.c.b16 %v2815, %v2813
    %v2932 = vpack.c.b16 %v2816, %v2814
    %v2933 = vpack.c.b16 %v2819, %v2817
    %v2934 = vpack.c.b16 %v2820, %v2818
    %v2935 = vpack.c.b16 %v2823, %v2821
    %v2936 = vpack.c.b16 %v2824, %v2822
    %v2937 = vpack.c.b16 %v2827, %v2825
    %v2938 = vpack.c.b16 %v2828, %v2826
    %v2939 = vpack.c.b16 %v2831, %v2829
    %v2940 = vpack.c.b16 %v2832, %v2830
    %v2941 = vpack.c.b16 %v2835, %v2833
    %v2942 = vpack.c.b16 %v2836, %v2834
    %v2943 = vpack.c.b16 %v2839, %v2837
    %v2944 = vpack.c.b16 %v2840, %v2838
    %v2945 = vpack.c.b16 %v2843, %v2841
    %v2946 = vpack.c.b16 %v2844, %v2842
    %v2947 = vpack.c.b16 %v2847, %v2845
    %v2948 = vpack.c.b16 %v2848, %v2846
    %v2949 = vpack.c.b16 %v2851, %v2849
    %v2950 = vpack.c.b16 %v2852, %v2850
    %v2951 = vpack.c.b16 %v2855, %v2853
    %v2952 = vpack.c.b16 %v2856, %v2854
    %v2953 = vpack.c.b16 %v2859, %v2857
    %v2954 = vpack.c.b16 %v2860, %v2858
    %v2955 = vpack.c.b16 %v2863, %v2861
    %v2956 = vpack.c.b16 %v2864, %v2862
    %v2957 = vpack.c.b16 %v2867, %v2865
    %v2958 = vpack.c.b16 %v2868, %v2866
    %v2959 = vpack.c.b16 %v2871, %v2869
    %v2960 = vpack.c.b16 %v2872, %v2870
    %v2961 = vpack.c.b16 %v2875, %v2873
    %v2962 = vpack.c.b16 %v2876, %v2874
    %v2963 = vpack.c.b16 %v2879, %v2877
    %v2964 = vpack.c.b16 %v2880, %v2878
    %v2965 = vpack.c.b16 %v2883, %v2881
    %v2966 = vpack.c.b16 %v2884, %v2882
    %v2967 = vpack.c.b16 %v2887, %v2885
    %v2968 = vpack.c.b16 %v2888, %v2886
    %v2969 = vpack.c.b16 %v2891, %v2889
    %v2970 = vpack.c.b16 %v2892, %v2890
    %v2971 = vpack.c.b16 %v2895, %v2893
    %v2972 = vpack.c.b16 %v2896, %v2894
    %v2973 = vpack.c.b16 %v2899, %v2897
    %v2974 = vpack.c.b16 %v2900, %v2898
    %v2975 = vpack.c.b16 %v2903, %v2901
    %v2976 = vpack.c.b16 %v2904, %v2902
    %v2977 = vpack.c.b16 %v2907, %v2905
    %v2978 = vpack.c.b16 %v2908, %v2906
    %v2979 = vpack.c.b16 %v2911, %v2909
    %v2980 = vpack.c.b16 %v2912, %v2910
    %v2981 = vpack.c.b16 %v2915, %v2913
    %v2982 = vpack.c.b16 %v2916, %v2914
    %v2983 = vpack.c.b16 %v2919, %v2917
    %v2984 = vpack.c.b16 %v2920, %v2918
    %3049 = vmatprep.subr.bf16.mxu0 %v2922
    %3050 = vmatpush1.bf16.msra.mxu0 %v2921
    %3051 = vmatprep.subr.bf16.mxu0 %v2924
    %3052 = vmatpush1.bf16.msra.mxu0 %v2923
    %3053 = vmatprep.subr.bf16.mxu0 %v2926
    %3054 = vmatpush1.bf16.msra.mxu0 %v2925
    %3055 = vmatprep.subr.bf16.mxu0 %v2928
    %3056 = vmatpush1.bf16.msra.mxu0 %v2927
    %3057 = vmatprep.subr.bf16.mxu0 %v2930
    %3058 = vmatpush1.bf16.msra.mxu0 %v2929
    %3059 = vmatprep.subr.bf16.mxu0 %v2932
    %3060 = vmatpush1.bf16.msra.mxu0 %v2931
    %3061 = vmatprep.subr.bf16.mxu0 %v2934
    %3062 = vmatpush1.bf16.msra.mxu0 %v2933
    %3063 = vmatprep.subr.bf16.mxu0 %v2936
    %3064 = vmatpush1.bf16.msra.mxu0 %v2935
    %3065 = vmatprep.subr.bf16.mxu0 %v2938
    %3066 = vmatpush1.bf16.msra.mxu0 %v2937
    %3067 = vmatprep.subr.bf16.mxu0 %v2940
    %3068 = vmatpush1.bf16.msra.mxu0 %v2939
    %3069 = vmatprep.subr.bf16.mxu0 %v2942
    %3070 = vmatpush1.bf16.msra.mxu0 %v2941
    %3071 = vmatprep.subr.bf16.mxu0 %v2944
    %3072 = vmatpush1.bf16.msra.mxu0 %v2943
    %3073 = vmatprep.subr.bf16.mxu0 %v2946
    %3074 = vmatpush1.bf16.msra.mxu0 %v2945
    %3075 = vmatprep.subr.bf16.mxu0 %v2948
    %3076 = vmatpush1.bf16.msra.mxu0 %v2947
    %3077 = vmatprep.subr.bf16.mxu0 %v2950
    %3078 = vmatpush1.bf16.msra.mxu0 %v2949
    %3079 = vmatprep.subr.bf16.mxu0 %v2952
    %3080 = vmatpush1.bf16.msra.mxu0 %v2951
    %3081 = vmatprep.mubr.bf16.mxu0 %v2650
    %3082 = vmatmul.mubr.bf16.gmra.mrb[0].mxu0 %v2649
    %v3083 = vpop.f32.mrb[0].mxu0
    %v3084 = vadd.f32 %v2722, %v3083
    %v3085 = vpop.f32.mrb[0].mxu0
    %v3086 = vadd.f32 %v2726, %v3085
    %v3087 = vpop.f32.mrb[0].mxu0
    %v3088 = vadd.f32 %v2722, %v3087
    %v3089 = vpop.f32.mrb[0].mxu0
    %v3090 = vadd.f32 %v2726, %v3089
    %3091 = vdwg.mxu0
    %3092 = vmatprep.subr.bf16.mxu0 %v2954
    %3093 = vmatpush1.bf16.msra.mxu0 %v2953
    %3094 = vmatprep.subr.bf16.mxu0 %v2956
    %3095 = vmatpush1.bf16.msra.mxu0 %v2955
    %3096 = vmatprep.subr.bf16.mxu0 %v2958
    %3097 = vmatpush1.bf16.msra.mxu0 %v2957
    %3098 = vmatprep.subr.bf16.mxu0 %v2960
    %3099 = vmatpush1.bf16.msra.mxu0 %v2959
    %3100 = vmatprep.subr.bf16.mxu0 %v2962
    %3101 = vmatpush1.bf16.msra.mxu0 %v2961
    %3102 = vmatprep.subr.bf16.mxu0 %v2964
    %3103 = vmatpush1.bf16.msra.mxu0 %v2963
    %3104 = vmatprep.subr.bf16.mxu0 %v2966
    %3105 = vmatpush1.bf16.msra.mxu0 %v2965
    %3106 = vmatprep.subr.bf16.mxu0 %v2968
    %3107 = vmatpush1.bf16.msra.mxu0 %v2967
    %3108 = vmatprep.subr.bf16.mxu0 %v2970
    %3109 = vmatpush1.bf16.msra.mxu0 %v2969
    %3110 = vmatprep.subr.bf16.mxu0 %v2972
    %3111 = vmatpush1.bf16.msra.mxu0 %v2971
    %3112 = vmatprep.subr.bf16.mxu0 %v2974
    %3113 = vmatpush1.bf16.msra.mxu0 %v2973
    %3114 = vmatprep.subr.bf16.mxu0 %v2976
    %3115 = vmatpush1.bf16.msra.mxu0 %v2975
    %3116 = vmatprep.subr.bf16.mxu0 %v2978
    %3117 = vmatpush1.bf16.msra.mxu0 %v2977
    %3118 = vmatprep.subr.bf16.mxu0 %v2980
    %3119 = vmatpush1.bf16.msra.mxu0 %v2979
    %3120 = vmatprep.subr.bf16.mxu0 %v2982
    %3121 = vmatpush1.bf16.msra.mxu0 %v2981
    %3122 = vmatprep.subr.bf16.mxu0 %v2984
    %3123 = vmatpush1.bf16.msra.mxu0 %v2983
    %3124 = vmatprep.mubr.bf16.mxu0 %v2652
    %3125 = vmatmul.mubr.bf16.gmra.mrb[0].mxu0 %v2651
    %v3126 = vpop.f32.mrb[0].mxu0
    %v3127 = vadd.f32 %v3084, %v3126
    %v3128 = vpop.f32.mrb[0].mxu0
    %v3129 = vadd.f32 %v3086, %v3128
    %v3130 = vpop.f32.mrb[0].mxu0
    %v3131 = vadd.f32 %v3088, %v3130
    %v3132 = vpop.f32.mrb[0].mxu0
    %v3133 = vadd.f32 %v3090, %v3132
    %3134 = vdwg.mxu0
    %v3135 = vmax.f32 %v3127, 0.0
    %v3136 = vmax.f32 %v3129, 0.0
    %v3137 = vmax.f32 %v3131, 0.0
    %v3138 = vmax.f32 %v3133, 0.0
    %v3139 = vpack.c.bf16 %v3137, %v3135
    %v3140 = vpack.c.bf16 %v3138, %v3136
    %v3141 = vld [vmem:[#allocation11] sm:$0xf]
    %v3142 = vld [vmem:[#allocation11 + $0x4] sm:$0xf]
    %v3143 = vld [vmem:[#allocation11 + $0x8] sm:$0xf]
    %v3144 = vld [vmem:[#allocation11 + $0xc] sm:$0xf]
    %v3145 = vld [vmem:[#allocation11 + $0x10] sm:$0xf]
    %v3146 = vld [vmem:[#allocation11 + $0x14] sm:$0xf]
    %v3147 = vld [vmem:[#allocation11 + $0x18] sm:$0xf]
    %v3148 = vld [vmem:[#allocation11 + $0x1c] sm:$0xf]
    %v3149 = vld [vmem:[#allocation11 + $0x20] sm:$0xf]
    %v3150 = vld [vmem:[#allocation11 + $0x24] sm:$0xf]
    %v3151 = vld [vmem:[#allocation11 + $0x28] sm:$0xf]
    %v3152 = vld [vmem:[#allocation11 + $0x2c] sm:$0xf]
    %v3153 = vld [vmem:[#allocation11 + $0x30] sm:$0xf]
    %v3154 = vld [vmem:[#allocation11 + $0x34] sm:$0xf]
    %v3155 = vld [vmem:[#allocation11 + $0x38] sm:$0xf]
    %v3156 = vld [vmem:[#allocation11 + $0x3c] sm:$0xf]
    %v3157 = vld [vmem:[#allocation11 + $0x40] sm:$0xf]
    %v3158 = vld [vmem:[#allocation11 + $0x44] sm:$0xf]
    %v3159 = vld [vmem:[#allocation11 + $0x48] sm:$0xf]
    %v3160 = vld [vmem:[#allocation11 + $0x4c] sm:$0xf]
    %v3161 = vld [vmem:[#allocation11 + $0x50] sm:$0xf]
    %v3162 = vld [vmem:[#allocation11 + $0x54] sm:$0xf]
    %v3163 = vld [vmem:[#allocation11 + $0x58] sm:$0xf]
    %v3164 = vld [vmem:[#allocation11 + $0x5c] sm:$0xf]
    %v3165 = vld [vmem:[#allocation11 + $0x60] sm:$0xf]
    %v3166 = vld [vmem:[#allocation11 + $0x64] sm:$0xf]
    %v3167 = vld [vmem:[#allocation11 + $0x68] sm:$0xf]
    %v3168 = vld [vmem:[#allocation11 + $0x6c] sm:$0xf]
    %v3169 = vld [vmem:[#allocation11 + $0x70] sm:$0xf]
    %v3170 = vld [vmem:[#allocation11 + $0x74] sm:$0xf]
    %v3171 = vld [vmem:[#allocation11 + $0x78] sm:$0xf]
    %v3172 = vld [vmem:[#allocation11 + $0x7c] sm:$0xf]
    %v3173 = vld [vmem:[%s8] sm:$0x1]
    %v3175 = vlaneseq
    %v3176 = vshrl.u32 %v3175, 7
    %v3177 = vsub.s32 0, %v3176
    %v3178 = vrot.slane %v3173, %v3177
    %v3212 = vunpack.c.l.b16 %v3141
    %v3213 = vunpack.c.l.b16 %v3142
    %v3214 = vunpack.c.l.b16 %v3143
    %v3215 = vunpack.c.l.b16 %v3144
    %v3216 = vunpack.c.l.b16 %v3145
    %v3217 = vunpack.c.l.b16 %v3146
    %v3218 = vunpack.c.l.b16 %v3147
    %v3219 = vunpack.c.l.b16 %v3148
    %v3220 = vunpack.c.l.b16 %v3149
    %v3221 = vunpack.c.l.b16 %v3150
    %v3222 = vunpack.c.l.b16 %v3151
    %v3223 = vunpack.c.l.b16 %v3152
    %v3224 = vunpack.c.l.b16 %v3153
    %v3225 = vunpack.c.l.b16 %v3154
    %v3226 = vunpack.c.l.b16 %v3155
    %v3227 = vunpack.c.l.b16 %v3156
    %v3228 = vunpack.c.l.b16 %v3157
    %v3229 = vunpack.c.l.b16 %v3158
    %v3230 = vunpack.c.l.b16 %v3159
    %v3231 = vunpack.c.l.b16 %v3160
    %v3232 = vunpack.c.l.b16 %v3161
    %v3233 = vunpack.c.l.b16 %v3162
    %v3234 = vunpack.c.l.b16 %v3163
    %v3235 = vunpack.c.l.b16 %v3164
    %v3236 = vunpack.c.l.b16 %v3165
    %v3237 = vunpack.c.l.b16 %v3166
    %v3238 = vunpack.c.l.b16 %v3167
    %v3239 = vunpack.c.l.b16 %v3168
    %v3240 = vunpack.c.l.b16 %v3169
    %v3241 = vunpack.c.l.b16 %v3170
    %v3242 = vunpack.c.l.b16 %v3171
    %v3243 = vunpack.c.l.b16 %v3172
    %v3244 = vpack.c.b16 %v3213, %v3212
    %v3245 = vpack.c.b16 %v3215, %v3214
    %v3246 = vpack.c.b16 %v3217, %v3216
    %v3247 = vpack.c.b16 %v3219, %v3218
    %v3248 = vpack.c.b16 %v3221, %v3220
    %v3249 = vpack.c.b16 %v3223, %v3222
    %v3250 = vpack.c.b16 %v3225, %v3224
    %v3251 = vpack.c.b16 %v3227, %v3226
    %v3252 = vpack.c.b16 %v3229, %v3228
    %v3253 = vpack.c.b16 %v3231, %v3230
    %v3254 = vpack.c.b16 %v3233, %v3232
    %v3255 = vpack.c.b16 %v3235, %v3234
    %v3256 = vpack.c.b16 %v3237, %v3236
    %v3257 = vpack.c.b16 %v3239, %v3238
    %v3258 = vpack.c.b16 %v3241, %v3240
    %v3259 = vpack.c.b16 %v3243, %v3242
    %3276 = vmatprep.subr.bf16.mxu0 0
    %3277 = vmatpush1.bf16.msra.mxu0 %v3244
    %3278 = vmatprep.subr.bf16.mxu0 0
    %3279 = vmatpush1.bf16.msra.mxu0 %v3245
    %3280 = vmatprep.subr.bf16.mxu0 0
    %3281 = vmatpush1.bf16.msra.mxu0 %v3246
    %3282 = vmatprep.subr.bf16.mxu0 0
    %3283 = vmatpush1.bf16.msra.mxu0 %v3247
    %3284 = vmatprep.subr.bf16.mxu0 0
    %3285 = vmatpush1.bf16.msra.mxu0 %v3248
    %3286 = vmatprep.subr.bf16.mxu0 0
    %3287 = vmatpush1.bf16.msra.mxu0 %v3249
    %3288 = vmatprep.subr.bf16.mxu0 0
    %3289 = vmatpush1.bf16.msra.mxu0 %v3250
    %3290 = vmatprep.subr.bf16.mxu0 0
    %3291 = vmatpush1.bf16.msra.mxu0 %v3251
    %3292 = vmatprep.subr.bf16.mxu0 0
    %3293 = vmatpush1.bf16.msra.mxu0 %v3252
    %3294 = vmatprep.subr.bf16.mxu0 0
    %3295 = vmatpush1.bf16.msra.mxu0 %v3253
    %3296 = vmatprep.subr.bf16.mxu0 0
    %3297 = vmatpush1.bf16.msra.mxu0 %v3254
    %3298 = vmatprep.subr.bf16.mxu0 0
    %3299 = vmatpush1.bf16.msra.mxu0 %v3255
    %3300 = vmatprep.subr.bf16.mxu0 0
    %3301 = vmatpush1.bf16.msra.mxu0 %v3256
    %3302 = vmatprep.subr.bf16.mxu0 0
    %3303 = vmatpush1.bf16.msra.mxu0 %v3257
    %3304 = vmatprep.subr.bf16.mxu0 0
    %3305 = vmatpush1.bf16.msra.mxu0 %v3258
    %3306 = vmatprep.subr.bf16.mxu0 0
    %3307 = vmatpush1.bf16.msra.mxu0 %v3259
    %3308 = vmatprep.mubr.bf16.mxu0 %v3140
    %3309 = vmatmul.mubr.bf16.gmra.mrb[0].mxu0 %v3139
    %v3310 = vpop.f32.mrb[0].mxu0
    %v3311 = vadd.f32 %v3178, %v3310
    %v3312 = vpop.f32.mrb[0].mxu0
    %v3313 = vpop.f32.mrb[0].mxu0
    %v3314 = vadd.f32 %v3178, %v3313
    %v3315 = vpop.f32.mrb[0].mxu0
    %3316 = vdwg.mxu0
    %3317 = vst [vmem:[#allocation13] sm:$0xff] %v3311
    %3318 = vst [vmem:[#allocation13 + $0x8] sm:$0xff] %v3314
    // Predicated region
    $region62: #{tpu_custom_call.1} parent=1 // pred_check
      _
    $region63: #{tpu_custom_call.1} parent=1 // pred_check_branch
      %3320 = sbr.rel (0) target = $region65
    $region64: #{tpu_custom_call.1} parent=1 // pred_region
      %s3322 = ssub.s32 256, 256
      %3323 = vsyncadd [#allocation4], %s3322
      %s3324 = sshll.u32 [#allocation13], 4
      %s3325 = int_to_ptr.vmem [resolvable:$true] %s3324
      %3330 = dma.vmem_to_hbm [thread:$0]  %s3325, 256, %s9, [#allocation4], 128, 128, 8
    $region65: #{tpu_custom_call.1} parent=1 // pred_fallthru
      _
    // Predicated region
    $region66: #{tpu_custom_call.1} parent=1 // pred_check
      _
    $region67: #{tpu_custom_call.1} parent=1 // pred_check_branch
      %3332 = sbr.rel (0) target = $region69
    $region68: #{tpu_custom_call.1} parent=1 // pred_region
      %3333 = dma.done [#allocation4], 256
    $region69: #{tpu_custom_call.1} parent=1 // pred_fallthru
      _
    %3334 = vsyncpa [#allocation3], 1
    %3335 = vsyncpa [#allocation6], 1
    %3336 = vsyncpa [#allocation9], 1
    %3337 = vsyncpa [#allocation12], 1
    %3338 = vsyncpa [#allocation4], 1

</llo_original>
